<compile_context>
chip_gen: v7x
topology: tpu7x:2x2x1
jax: 0.10.0
libtpu: 0.0.40
codegen_flags: <defaults>
</compile_context>

<pallas_src>
import functools

import numpy as np
import jax
import jax.numpy as jnp
from jax.experimental import pallas as pl
from jax.experimental.pallas import tpu as pltpu


def _round_up(x, m):
    return ((x + m - 1) // m) * m


def _diffpool_kernel(nvalid_ref,                       # SMEM scalar prefetch [B]
                     a_ref, h_ref,
                     wsf_ref, wnf_ref, bf_ref,
                     wsp_ref, wnp_ref, bp_ref,
                     adjb_ref, hpool_ref, ent_ref,
                     *, assign_dim):
    g = pl.program_id(0)
    n_valid = nvalid_ref[g]                            # valid node count of graph g

    a = a_ref[0]                                       # [Np, Np]    bf16 (0/1)
    h = h_ref[0]                                       # [Np, Din_p] f32
    np_pad = a.shape[0]

    # --- GraphSAGE "mean" aggregation (bf16 MXU, f32 accumulate) ---
    deg = jnp.sum(a, axis=1, keepdims=True, dtype=jnp.float32)            # [Np,1]
    agg = jnp.dot(a, h.astype(jnp.bfloat16),
                  preferred_element_type=jnp.float32)                     # [Np,Din_p]
    agg = agg * pl.reciprocal(jnp.maximum(deg, 1.0), approx=True)

    # --- feat_gc: SAGEConv(Din -> Dh), ReLU ---
    feat = (jnp.dot(h, wsf_ref[...], preferred_element_type=jnp.float32)
            + jnp.dot(agg, wnf_ref[...], preferred_element_type=jnp.float32)
            + bf_ref[...])
    feat = jnp.maximum(feat, 0.0)                                         # [Np,Dh_p]

    # --- pool_gc: SAGEConv(Din -> Da), ReLU ---
    pool = (jnp.dot(h, wsp_ref[...], preferred_element_type=jnp.float32)
            + jnp.dot(agg, wnp_ref[...], preferred_element_type=jnp.float32)
            + bp_ref[...])
    pool = jnp.maximum(pool, 0.0)                                         # [Np,Da_p]

    # --- masked softmax over the (lane-padded) assignment dim ---
    col_valid = jax.lax.broadcasted_iota(jnp.int32, pool.shape, 1) < assign_dim
    m = jnp.max(jnp.where(col_valid, pool, 0.0), axis=1, keepdims=True)
    p = jnp.where(col_valid, jnp.exp(pool - m), 0.0)
    p = p * pl.reciprocal(jnp.sum(p, axis=1, keepdims=True), approx=True)

    # zero out padded node rows (graphs share a common padded block size)
    row_valid = jax.lax.broadcasted_iota(jnp.int32, (np_pad, 1), 0) < n_valid
    p = jnp.where(row_valid, p, 0.0)

    # --- pooled features: S_g^T @ feat_g  (contract node dim, no transpose) ---
    hpool_ref[0] = jax.lax.dot_general(
        p, feat, dimension_numbers=(((0,), (0,)), ((), ())),
        preferred_element_type=jnp.float32)                               # [Da_p,Dh_p]

    # --- pooled adjacency block: S_g^T @ (A_g @ S_g) ---
    a_s = jnp.dot(a, p.astype(jnp.bfloat16),
                  preferred_element_type=jnp.float32)                     # [Np,Da_p]
    adjb_ref[0] = jax.lax.dot_general(
        p, a_s, dimension_numbers=(((0,), (0,)), ((), ())),
        preferred_element_type=jnp.float32)                               # [Da_p,Da_p]

    # --- entropy of this graph's assignment rows (padded rows/cols give 0) ---
    logp = jnp.where(p > 0.0, jnp.log(jnp.maximum(p, 1e-30)), 0.0)
    ent = -jnp.sum(p * logp)
    ent_ref[0] = jnp.broadcast_to(ent, ent_ref.shape[1:])


def diffpool_forward(adj, h, params, batch_num_nodes, assign_dim):
    """DiffPool forward.  adj: [N,N] dense block-diag (row = dst), h: [N,Din].
    Returns (adj_new [K,K], h_pool [K,Dh], entropy_loss scalar)."""
    batch_num_nodes = [int(n) for n in batch_num_nodes]
    bsz = len(batch_num_nodes)
    _, din = h.shape
    dh = params["w_self_feat"].shape[1]
    da = assign_dim
    k_dim = bsz * da

    np_pad = _round_up(max(batch_num_nodes), 128)
    din_p = _round_up(din, 128)
    dh_p = _round_up(dh, 128)
    da_p = _round_up(da, 128)

    # --- per-graph padded blocks (cheap layout plumbing outside the kernel) ---
    offs = np.concatenate([[0], np.cumsum(batch_num_nodes)])
    a_blocks, h_blocks = [], []
    for g in range(bsz):
        s, n_g = int(offs[g]), batch_num_nodes[g]
        a_g = jnp.pad(adj[s:s + n_g, s:s + n_g],
                      ((0, np_pad - n_g), (0, np_pad - n_g)))
        h_g = jnp.pad(h[s:s + n_g], ((0, np_pad - n_g), (0, din_p - din)))
        a_blocks.append(a_g)
        h_blocks.append(h_g)
    a_blocks = jnp.stack(a_blocks).astype(jnp.bfloat16)   # [B,Np,Np], exact 0/1
    h_blocks = jnp.stack(h_blocks).astype(jnp.float32)    # [B,Np,Din_p]
    nvalid = jnp.asarray(batch_num_nodes, jnp.int32)

    pad2 = lambda w, r, c: jnp.pad(w, ((0, r - w.shape[0]), (0, c - w.shape[1])))
    wsf = pad2(params["w_self_feat"], din_p, dh_p)
    wnf = pad2(params["w_neigh_feat"], din_p, dh_p)
    bfe = pad2(params["b_feat"], 1, dh_p)
    wsp = pad2(params["w_self_pool"], din_p, da_p)
    wnp_ = pad2(params["w_neigh_pool"], din_p, da_p)
    bpo = pad2(params["b_pool"], 1, da_p)

    kernel = functools.partial(_diffpool_kernel, assign_dim=da)

    grid_spec = pltpu.PrefetchScalarGridSpec(
        num_scalar_prefetch=1,
        grid=(bsz,),
        in_specs=[
            pl.BlockSpec((1, np_pad, np_pad), lambda g, nv: (g, 0, 0)),
            pl.BlockSpec((1, np_pad, din_p), lambda g, nv: (g, 0, 0)),
            pl.BlockSpec((din_p, dh_p), lambda g, nv: (0, 0)),
            pl.BlockSpec((din_p, dh_p), lambda g, nv: (0, 0)),
            pl.BlockSpec((1, dh_p), lambda g, nv: (0, 0)),
            pl.BlockSpec((din_p, da_p), lambda g, nv: (0, 0)),
            pl.BlockSpec((din_p, da_p), lambda g, nv: (0, 0)),
            pl.BlockSpec((1, da_p), lambda g, nv: (0, 0)),
        ],
        out_specs=(
            pl.BlockSpec((1, da_p, da_p), lambda g, nv: (g, 0, 0)),
            pl.BlockSpec((1, da_p, dh_p), lambda g, nv: (g, 0, 0)),
            pl.BlockSpec((1, 8, 128), lambda g, nv: (g, 0, 0)),
        ),
    )

    adjb, hpoolb, entb = pl.pallas_call(
        kernel,
        grid_spec=grid_spec,
        out_shape=(
            jax.ShapeDtypeStruct((bsz, da_p, da_p), jnp.float32),
            jax.ShapeDtypeStruct((bsz, da_p, dh_p), jnp.float32),
            jax.ShapeDtypeStruct((bsz, 8, 128), jnp.float32),
        ),
        compiler_params=pltpu.CompilerParams(
            dimension_semantics=("parallel",),        # 2x on v7x megacore
            vmem_limit_bytes=32 * 1024 * 1024,        # safe on v5e/v6e/v7x
        ),
    )(nvalid, a_blocks, h_blocks, wsf, wnf, bfe, wsp, wnp_, bpo)

    # --- strip lane padding & assemble block-diagonal outputs (tiny, in XLA) ---
    h_pool = hpoolb[:, :da, :dh].reshape(k_dim, dh)
    diag = adjb[:, :da, :da]
    adj_new = jnp.einsum("bij,bc->bicj", diag,
                         jnp.eye(bsz, dtype=diag.dtype)).reshape(k_dim, k_dim)
    ent = jnp.sum(entb[:, 0, 0])
    return adj_new, h_pool, ent


def _reference(adj, h, params, graph_ids, batch_size, assign_dim):
    """Pure-JAX f32 reference mirroring the PyTorch forward."""
    deg = jnp.sum(adj, axis=1, keepdims=True)
    agg = (adj @ h) / jnp.maximum(deg, 1.0)
    feat = jnp.maximum(h @ params["w_self_feat"] + agg @ params["w_neigh_feat"]
                       + params["b_feat"], 0.0)
    pool = jnp.maximum(h @ params["w_self_pool"] + agg @ params["w_neigh_pool"]
                       + params["b_pool"], 0.0)
    pool = jax.nn.softmax(pool, axis=1)
    da = assign_dim
    col_graph = jnp.repeat(jnp.arange(batch_size), da)
    mask = (graph_ids[:, None] == col_graph[None, :]).astype(jnp.float32)
    s = jnp.tile(pool, (1, batch_size)) * mask
    h_pool = s.T @ feat
    adj_new = s.T @ (adj @ s)
    logp = jnp.where(s > 0.0, jnp.log(jnp.maximum(s, 1e-30)), 0.0)
    ent = -jnp.sum(s * logp)
    return adj_new, h_pool, ent


if __name__ == "__main__":
    key = jax.random.PRNGKey(0)
    # Small batched graph: 2 graphs of unequal size (exercises per-graph counts).
    batch_num_nodes = [7, 9]
    batch_size = len(batch_num_nodes)
    N = sum(batch_num_nodes)
    input_dim = 8
    output_feat_dim = 16
    assign_dim = 4

    k1, k2, k3, k4, k5, k6, k7, k8 = jax.random.split(key, 8)

    # Node features.
    h = jax.random.normal(k1, (N, input_dim), dtype=jnp.float32)

    # Block-diagonal dense adjacency (edges only within each graph, no self loops).
    graph_ids = jnp.asarray(
        np.repeat(np.arange(batch_size), batch_num_nodes), jnp.int32)
    same_graph = (graph_ids[:, None] == graph_ids[None, :])
    rand_edges = (jax.random.uniform(k2, (N, N)) < 0.35)
    adj = (rand_edges & same_graph).astype(jnp.float32)
    adj = adj * (1.0 - jnp.eye(N, dtype=jnp.float32))

    # Deterministic SAGEConv parameters.
    params = {
        "w_self_feat":  0.1 * jax.random.normal(k3, (input_dim, output_feat_dim), jnp.float32),
        "w_neigh_feat": 0.1 * jax.random.normal(k4, (input_dim, output_feat_dim), jnp.float32),
        "b_feat":       0.1 * jax.random.normal(k5, (1, output_feat_dim), jnp.float32),
        "w_self_pool":  0.1 * jax.random.normal(k6, (input_dim, assign_dim), jnp.float32),
        "w_neigh_pool": 0.1 * jax.random.normal(k7, (input_dim, assign_dim), jnp.float32),
        "b_pool":       0.1 * jax.random.normal(k8, (1, assign_dim), jnp.float32),
    }

    adj_new, h_pool, ent = diffpool_forward(adj, h, params, batch_num_nodes, assign_dim)
    jax.block_until_ready((adj_new, h_pool, ent))

    # Sanity check against the pure-JAX f32 reference (kernel uses bf16 MXU inputs
    # and approx reciprocals, so tolerances are loosened accordingly).
    r_adj, r_h, r_ent = _reference(adj, h, params, graph_ids, batch_size, assign_dim)
    assert jnp.allclose(adj_new, r_adj, atol=5e-2, rtol=5e-2)
    assert jnp.allclose(h_pool, r_h, atol=5e-2, rtol=5e-2)
    assert jnp.allclose(ent, r_ent, atol=5e-2, rtol=5e-2)

    print("KERNEL_OK")
</pallas_src>

<mosaic_0001>
module attributes {stable_mosaic.version = 11 : i64} {
  func.func @_diffpool_kernel(%arg0: i32, %arg1: memref<2xi32, #tpu.memory_space<smem>>, %arg2: memref<1x128x128xbf16, #tpu.memory_space<vmem>>, %arg3: memref<1x128x128xf32, #tpu.memory_space<vmem>>, %arg4: memref<128x128xf32, #tpu.memory_space<vmem>>, %arg5: memref<128x128xf32, #tpu.memory_space<vmem>>, %arg6: memref<1x128xf32, #tpu.memory_space<vmem>>, %arg7: memref<128x128xf32, #tpu.memory_space<vmem>>, %arg8: memref<128x128xf32, #tpu.memory_space<vmem>>, %arg9: memref<1x128xf32, #tpu.memory_space<vmem>>, %arg10: memref<1x128x128xf32, #tpu.memory_space<vmem>>, %arg11: memref<1x128x128xf32, #tpu.memory_space<vmem>>, %arg12: memref<1x8x128xf32, #tpu.memory_space<vmem>>) attributes {dimension_semantics = [#tpu.dimension_semantics<parallel>], iteration_bounds = array<i64: 2>, scalar_prefetch = 1 : i64, scratch_operands = 0 : i64, tpu.core_type = #tpu.core_type<tc>, window_params = [{transform_indices = @transform_0, window_bounds = array<i64: 1, 128, 128>}, {transform_indices = @transform_1, window_bounds = array<i64: 1, 128, 128>}, {pipeline_mode = #tpu.pipeline_mode<synchronous>, transform_indices = @transform_2, window_bounds = array<i64: 128, 128>}, {pipeline_mode = #tpu.pipeline_mode<synchronous>, transform_indices = @transform_3, window_bounds = array<i64: 128, 128>}, {pipeline_mode = #tpu.pipeline_mode<synchronous>, transform_indices = @transform_4, window_bounds = array<i64: 1, 128>}, {pipeline_mode = #tpu.pipeline_mode<synchronous>, transform_indices = @transform_5, window_bounds = array<i64: 128, 128>}, {pipeline_mode = #tpu.pipeline_mode<synchronous>, transform_indices = @transform_6, window_bounds = array<i64: 128, 128>}, {pipeline_mode = #tpu.pipeline_mode<synchronous>, transform_indices = @transform_7, window_bounds = array<i64: 1, 128>}, {transform_indices = @transform_8, window_bounds = array<i64: 1, 128, 128>}, {transform_indices = @transform_9, window_bounds = array<i64: 1, 128, 128>}, {transform_indices = @transform_10, window_bounds = array<i64: 1, 8, 128>}]} {
    %0 = arith.index_cast %arg0 : i32 to index
    %1 = memref.load %arg1[%0] : memref<2xi32, #tpu.memory_space<smem>>
    %c0 = arith.constant 0 : index
    %c0_0 = arith.constant 0 : index
    %c0_1 = arith.constant 0 : index
    %2 = vector.load %arg2[%c0, %c0_0, %c0_1] : memref<1x128x128xbf16, #tpu.memory_space<vmem>>, vector<1x128x128xbf16>
    %3 = vector.shape_cast %2 : vector<1x128x128xbf16> to vector<128x128xbf16>
    %c0_2 = arith.constant 0 : index
    %c0_3 = arith.constant 0 : index
    %c0_4 = arith.constant 0 : index
    %4 = vector.load %arg3[%c0_2, %c0_3, %c0_4] : memref<1x128x128xf32, #tpu.memory_space<vmem>>, vector<1x128x128xf32>
    %5 = vector.shape_cast %4 : vector<1x128x128xf32> to vector<128x128xf32>
    %6 = arith.extf %3 : vector<128x128xbf16> to vector<128x128xf32>
    %cst = arith.constant dense<0.000000e+00> : vector<128xf32>
    %7 = vector.multi_reduction <add>, %6, %cst [1] : vector<128x128xf32> to vector<128xf32>
    %8 = vector.shape_cast %7 : vector<128xf32> to vector<128x1xf32>
    %9 = arith.truncf %5 : vector<128x128xf32> to vector<128x128xbf16>
    %cst_5 = arith.constant dense<0.000000e+00> : vector<128x128xf32>
    %10 = tpu.matmul %3, %9, %cst_5 {dimension_numbers = #tpu.dot_dimension_numbers<[1], [0], [0], [1], [0, 0, 1, 1], [], []>} : vector<128x128xbf16>, vector<128x128xbf16>, vector<128x128xf32> -> vector<128x128xf32>
    %cst_6 = arith.constant 1.000000e+00 : f32
    %11 = vector.broadcast %cst_6 : f32 to vector<128x1xf32>
    %12 = arith.maximumf %8, %11 : vector<128x1xf32>
    %13 = tpu.reciprocal %12 {approx = true} : vector<128x1xf32> -> vector<128x1xf32>
    %14 = vector.broadcast %13 : vector<128x1xf32> to vector<128x128xf32>
    %15 = arith.mulf %10, %14 : vector<128x128xf32>
    %c0_7 = arith.constant 0 : index
    %c0_8 = arith.constant 0 : index
    %16 = vector.load %arg4[%c0_7, %c0_8] : memref<128x128xf32, #tpu.memory_space<vmem>>, vector<128x128xf32>
    %cst_9 = arith.constant dense<0.000000e+00> : vector<128x128xf32>
    %17 = tpu.matmul %5, %16, %cst_9 {dimension_numbers = #tpu.dot_dimension_numbers<[1], [0], [0], [1], [0, 0, 1, 1], [], []>} : vector<128x128xf32>, vector<128x128xf32>, vector<128x128xf32> -> vector<128x128xf32>
    %c0_10 = arith.constant 0 : index
    %c0_11 = arith.constant 0 : index
    %18 = vector.load %arg5[%c0_10, %c0_11] : memref<128x128xf32, #tpu.memory_space<vmem>>, vector<128x128xf32>
    %cst_12 = arith.constant dense<0.000000e+00> : vector<128x128xf32>
    %19 = tpu.matmul %15, %18, %cst_12 {dimension_numbers = #tpu.dot_dimension_numbers<[1], [0], [0], [1], [0, 0, 1, 1], [], []>} : vector<128x128xf32>, vector<128x128xf32>, vector<128x128xf32> -> vector<128x128xf32>
    %20 = arith.addf %17, %19 : vector<128x128xf32>
    %c0_13 = arith.constant 0 : index
    %c0_14 = arith.constant 0 : index
    %21 = vector.load %arg6[%c0_13, %c0_14] : memref<1x128xf32, #tpu.memory_space<vmem>>, vector<1x128xf32>
    %22 = vector.broadcast %21 : vector<1x128xf32> to vector<128x128xf32>
    %23 = arith.addf %20, %22 : vector<128x128xf32>
    %cst_15 = arith.constant 0.000000e+00 : f32
    %24 = vector.broadcast %cst_15 : f32 to vector<128x128xf32>
    %25 = arith.maximumf %23, %24 : vector<128x128xf32>
    %c0_16 = arith.constant 0 : index
    %c0_17 = arith.constant 0 : index
    %26 = vector.load %arg7[%c0_16, %c0_17] : memref<128x128xf32, #tpu.memory_space<vmem>>, vector<128x128xf32>
    %cst_18 = arith.constant dense<0.000000e+00> : vector<128x128xf32>
    %27 = tpu.matmul %5, %26, %cst_18 {dimension_numbers = #tpu.dot_dimension_numbers<[1], [0], [0], [1], [0, 0, 1, 1], [], []>} : vector<128x128xf32>, vector<128x128xf32>, vector<128x128xf32> -> vector<128x128xf32>
    %c0_19 = arith.constant 0 : index
    %c0_20 = arith.constant 0 : index
    %28 = vector.load %arg8[%c0_19, %c0_20] : memref<128x128xf32, #tpu.memory_space<vmem>>, vector<128x128xf32>
    %cst_21 = arith.constant dense<0.000000e+00> : vector<128x128xf32>
    %29 = tpu.matmul %15, %28, %cst_21 {dimension_numbers = #tpu.dot_dimension_numbers<[1], [0], [0], [1], [0, 0, 1, 1], [], []>} : vector<128x128xf32>, vector<128x128xf32>, vector<128x128xf32> -> vector<128x128xf32>
    %30 = arith.addf %27, %29 : vector<128x128xf32>
    %c0_22 = arith.constant 0 : index
    %c0_23 = arith.constant 0 : index
    %31 = vector.load %arg9[%c0_22, %c0_23] : memref<1x128xf32, #tpu.memory_space<vmem>>, vector<1x128xf32>
    %32 = vector.broadcast %31 : vector<1x128xf32> to vector<128x128xf32>
    %33 = arith.addf %30, %32 : vector<128x128xf32>
    %cst_24 = arith.constant 0.000000e+00 : f32
    %34 = vector.broadcast %cst_24 : f32 to vector<128x128xf32>
    %35 = arith.maximumf %33, %34 : vector<128x128xf32>
    %36 = tpu.iota {dimensions = array<i32: 1>} : vector<128x128xi32>
    %c4_i32 = arith.constant 4 : i32
    %37 = vector.broadcast %c4_i32 : i32 to vector<128x128xi32>
    %38 = arith.cmpi slt, %36, %37 : vector<128x128xi32>
    %cst_25 = arith.constant 0.000000e+00 : f32
    %39 = vector.broadcast %cst_25 : f32 to vector<128x128xf32>
    %40 = arith.select %38, %35, %39 : vector<128x128xi1>, vector<128x128xf32>
    %cst_26 = arith.constant dense<0xFF800000> : vector<128xf32>
    %41 = vector.multi_reduction <maximumf>, %40, %cst_26 [1] : vector<128x128xf32> to vector<128xf32>
    %42 = vector.shape_cast %41 : vector<128xf32> to vector<128x1xf32>
    %43 = vector.broadcast %42 : vector<128x1xf32> to vector<128x128xf32>
    %44 = arith.subf %35, %43 : vector<128x128xf32>
    %45 = math.exp %44 : vector<128x128xf32>
    %cst_27 = arith.constant 0.000000e+00 : f32
    %46 = vector.broadcast %cst_27 : f32 to vector<128x128xf32>
    %47 = arith.select %38, %45, %46 : vector<128x128xi1>, vector<128x128xf32>
    %cst_28 = arith.constant dense<0.000000e+00> : vector<128xf32>
    %48 = vector.multi_reduction <add>, %47, %cst_28 [1] : vector<128x128xf32> to vector<128xf32>
    %49 = vector.shape_cast %48 : vector<128xf32> to vector<128x1xf32>
    %50 = tpu.reciprocal %49 {approx = true} : vector<128x1xf32> -> vector<128x1xf32>
    %51 = vector.broadcast %50 : vector<128x1xf32> to vector<128x128xf32>
    %52 = arith.mulf %47, %51 : vector<128x128xf32>
    %53 = tpu.iota {dimensions = array<i32: 0>} : vector<128x1xi32>
    %54 = vector.broadcast %1 : i32 to vector<128x1xi32>
    %55 = arith.cmpi slt, %53, %54 : vector<128x1xi32>
    %cst_29 = arith.constant 0.000000e+00 : f32
    %56 = vector.shape_cast %55 : vector<128x1xi1> to vector<128x1xi1>
    %57 = vector.broadcast %56 : vector<128x1xi1> to vector<128x128xi1>
    %58 = vector.broadcast %cst_29 : f32 to vector<128x128xf32>
    %59 = arith.select %57, %52, %58 : vector<128x128xi1>, vector<128x128xf32>
    %cst_30 = arith.constant dense<0.000000e+00> : vector<128x128xf32>
    %60 = tpu.matmul %59, %25, %cst_30 {dimension_numbers = #tpu.dot_dimension_numbers<[0], [0], [1], [1], [0, 1, 1, 1], [], []>} : vector<128x128xf32>, vector<128x128xf32>, vector<128x128xf32> -> vector<128x128xf32>
    %c0_31 = arith.constant 0 : index
    %c0_32 = arith.constant 0 : index
    %c0_33 = arith.constant 0 : index
    %61 = vector.load %arg11[%c0_31, %c0_32, %c0_33] : memref<1x128x128xf32, #tpu.memory_space<vmem>>, vector<1x128x128xf32>
    %62 = vector.shape_cast %61 : vector<1x128x128xf32> to vector<128x128xf32>
    %63 = vector.shape_cast %60 : vector<128x128xf32> to vector<1x128x128xf32>
    tpu.vector_store %arg11[%c0_31, %c0_32, %c0_33], %63 {strides = array<i32>} : memref<1x128x128xf32, #tpu.memory_space<vmem>>, vector<1x128x128xf32>,
    %64 = arith.truncf %59 : vector<128x128xf32> to vector<128x128xbf16>
    %cst_34 = arith.constant dense<0.000000e+00> : vector<128x128xf32>
    %65 = tpu.matmul %3, %64, %cst_34 {dimension_numbers = #tpu.dot_dimension_numbers<[1], [0], [0], [1], [0, 0, 1, 1], [], []>} : vector<128x128xbf16>, vector<128x128xbf16>, vector<128x128xf32> -> vector<128x128xf32>
    %cst_35 = arith.constant dense<0.000000e+00> : vector<128x128xf32>
    %66 = tpu.matmul %59, %65, %cst_35 {dimension_numbers = #tpu.dot_dimension_numbers<[0], [0], [1], [1], [0, 1, 1, 1], [], []>} : vector<128x128xf32>, vector<128x128xf32>, vector<128x128xf32> -> vector<128x128xf32>
    %c0_36 = arith.constant 0 : index
    %c0_37 = arith.constant 0 : index
    %c0_38 = arith.constant 0 : index
    %67 = vector.load %arg10[%c0_36, %c0_37, %c0_38] : memref<1x128x128xf32, #tpu.memory_space<vmem>>, vector<1x128x128xf32>
    %68 = vector.shape_cast %67 : vector<1x128x128xf32> to vector<128x128xf32>
    %69 = vector.shape_cast %66 : vector<128x128xf32> to vector<1x128x128xf32>
    tpu.vector_store %arg10[%c0_36, %c0_37, %c0_38], %69 {strides = array<i32>} : memref<1x128x128xf32, #tpu.memory_space<vmem>>, vector<1x128x128xf32>,
    %cst_39 = arith.constant 0.000000e+00 : f32
    %70 = vector.broadcast %cst_39 : f32 to vector<128x128xf32>
    %71 = arith.cmpf ogt, %59, %70 : vector<128x128xf32>
    %cst_40 = arith.constant 1.000000e-30 : f32
    %72 = vector.broadcast %cst_40 : f32 to vector<128x128xf32>
    %73 = arith.maximumf %59, %72 : vector<128x128xf32>
    %74 = math.log %73 : vector<128x128xf32>
    %cst_41 = arith.constant 0.000000e+00 : f32
    %75 = vector.broadcast %cst_41 : f32 to vector<128x128xf32>
    %76 = arith.select %71, %74, %75 : vector<128x128xi1>, vector<128x128xf32>
    %77 = arith.mulf %59, %76 : vector<128x128xf32>
    %78 = vector.shape_cast %77 : vector<128x128xf32> to vector<1x128x128xf32>
    %cst_42 = arith.constant dense<0.000000e+00> : vector<1xf32>
    %79 = vector.multi_reduction <add>, %78, %cst_42 [1, 2] : vector<1x128x128xf32> to vector<1xf32>
    %80 = vector.shape_cast %79 : vector<1xf32> to vector<1x1x1xf32>
    %81 = vector.extract %80[0, 0, 0] : f32 from vector<1x1x1xf32>
    %cst_43 = arith.constant 0.000000e+00 : f32
    %82 = arith.subf %cst_43, %81 : f32
    %83 = vector.broadcast %82 : f32 to vector<8x128xf32>
    %c0_44 = arith.constant 0 : index
    %c0_45 = arith.constant 0 : index
    %c0_46 = arith.constant 0 : index
    %84 = vector.load %arg12[%c0_44, %c0_45, %c0_46] : memref<1x8x128xf32, #tpu.memory_space<vmem>>, vector<1x8x128xf32>
    %85 = vector.shape_cast %84 : vector<1x8x128xf32> to vector<8x128xf32>
    %86 = vector.shape_cast %83 : vector<8x128xf32> to vector<1x8x128xf32>
    tpu.vector_store %arg12[%c0_44, %c0_45, %c0_46], %86 {strides = array<i32>} : memref<1x8x128xf32, #tpu.memory_space<vmem>>, vector<1x8x128xf32>,
    return
  }
  func.func @transform_0(%arg0: i32, %arg1: memref<2xi32, #tpu.memory_space<smem>>) -> (i32, i32, i32) {
    %c0_i32 = arith.constant 0 : i32
    %c0_i32_0 = arith.constant 0 : i32
    %c0_i32_1 = arith.constant 0 : i32
    return %arg0, %c0_i32, %c0_i32_0 : i32, i32, i32
  }
  func.func @transform_1(%arg0: i32, %arg1: memref<2xi32, #tpu.memory_space<smem>>) -> (i32, i32, i32) {
    %c0_i32 = arith.constant 0 : i32
    %c0_i32_0 = arith.constant 0 : i32
    %c0_i32_1 = arith.constant 0 : i32
    return %arg0, %c0_i32, %c0_i32_0 : i32, i32, i32
  }
  func.func @transform_2(%arg0: i32, %arg1: memref<2xi32, #tpu.memory_space<smem>>) -> (i32, i32) {
    %c0_i32 = arith.constant 0 : i32
    %c0_i32_0 = arith.constant 0 : i32
    %c0_i32_1 = arith.constant 0 : i32
    return %c0_i32, %c0_i32_0 : i32, i32
  }
  func.func @transform_3(%arg0: i32, %arg1: memref<2xi32, #tpu.memory_space<smem>>) -> (i32, i32) {
    %c0_i32 = arith.constant 0 : i32
    %c0_i32_0 = arith.constant 0 : i32
    %c0_i32_1 = arith.constant 0 : i32
    return %c0_i32, %c0_i32_0 : i32, i32
  }
  func.func @transform_4(%arg0: i32, %arg1: memref<2xi32, #tpu.memory_space<smem>>) -> (i32, i32) {
    %c0_i32 = arith.constant 0 : i32
    %c0_i32_0 = arith.constant 0 : i32
    %c0_i32_1 = arith.constant 0 : i32
    return %c0_i32, %c0_i32_0 : i32, i32
  }
  func.func @transform_5(%arg0: i32, %arg1: memref<2xi32, #tpu.memory_space<smem>>) -> (i32, i32) {
    %c0_i32 = arith.constant 0 : i32
    %c0_i32_0 = arith.constant 0 : i32
    %c0_i32_1 = arith.constant 0 : i32
    return %c0_i32, %c0_i32_0 : i32, i32
  }
  func.func @transform_6(%arg0: i32, %arg1: memref<2xi32, #tpu.memory_space<smem>>) -> (i32, i32) {
    %c0_i32 = arith.constant 0 : i32
    %c0_i32_0 = arith.constant 0 : i32
    %c0_i32_1 = arith.constant 0 : i32
    return %c0_i32, %c0_i32_0 : i32, i32
  }
  func.func @transform_7(%arg0: i32, %arg1: memref<2xi32, #tpu.memory_space<smem>>) -> (i32, i32) {
    %c0_i32 = arith.constant 0 : i32
    %c0_i32_0 = arith.constant 0 : i32
    %c0_i32_1 = arith.constant 0 : i32
    return %c0_i32, %c0_i32_0 : i32, i32
  }
  func.func @transform_8(%arg0: i32, %arg1: memref<2xi32, #tpu.memory_space<smem>>) -> (i32, i32, i32) {
    %c0_i32 = arith.constant 0 : i32
    %c0_i32_0 = arith.constant 0 : i32
    %c0_i32_1 = arith.constant 0 : i32
    return %arg0, %c0_i32, %c0_i32_0 : i32, i32, i32
  }
  func.func @transform_9(%arg0: i32, %arg1: memref<2xi32, #tpu.memory_space<smem>>) -> (i32, i32, i32) {
    %c0_i32 = arith.constant 0 : i32
    %c0_i32_0 = arith.constant 0 : i32
    %c0_i32_1 = arith.constant 0 : i32
    return %arg0, %c0_i32, %c0_i32_0 : i32, i32, i32
  }
  func.func @transform_10(%arg0: i32, %arg1: memref<2xi32, #tpu.memory_space<smem>>) -> (i32, i32, i32) {
    %c0_i32 = arith.constant 0 : i32
    %c0_i32_0 = arith.constant 0 : i32
    %c0_i32_1 = arith.constant 0 : i32
    return %arg0, %c0_i32, %c0_i32_0 : i32, i32, i32
  }
}

</mosaic_0001>

<llo_original>
// kernel: tpu_custom_call.1
$region0: #{tpu_custom_call.1}
  #allocation0 [shape = 'u32[]', space=smem, size = 0x4, offset = 0x4, fixed_abs, tag = 'smem constant byte address 0x4 - core index']
  #allocation1 [shape = 'u32[144,128]{1,0:T(1,128)}', space=vmem, size = 0x12000, scoped, tag = 'internal scratch']
  #allocation2 [shape = 's32[1]{0}', space=sflag, size = 0x4, scoped, tag = 'scoped memory for tpu_custom_call.1']
  #allocation3 [shape = 'u8[512]{0}', space=smem, size = 0x200, scoped, tag = 'prefetched SMEM operand 0']
  %s0 = inlined_call_operand.hbm [shape: s32[2], index: 0, kind: input, shape index: {}]
  %s1 = inlined_call_operand.hbm [shape: bf16[2,128,128], index: 1, kind: input, shape index: {}]
  %s2 = inlined_call_operand.hbm [shape: f32[2,128,128], index: 2, kind: input, shape index: {}]
  %s3 = inlined_call_operand.hbm [shape: f32[128,128], index: 3, kind: input, shape index: {}]
  %s4 = inlined_call_operand.hbm [shape: f32[128,128], index: 4, kind: input, shape index: {}]
  %s5 = inlined_call_operand.vmem [shape: f32[1,128], index: 5, kind: input, shape index: {}]
  %s6 = inlined_call_operand.hbm [shape: f32[128,128], index: 6, kind: input, shape index: {}]
  %s7 = inlined_call_operand.hbm [shape: f32[128,128], index: 7, kind: input, shape index: {}]
  %s8 = inlined_call_operand.vmem [shape: f32[1,128], index: 8, kind: input, shape index: {}]
  %s9 = inlined_call_operand.hbm [shape: f32[2,128,128], index: 9, kind: output, shape index: {0}]
  %s10 = inlined_call_operand.hbm [shape: f32[2,128,128], index: 10, kind: output, shape index: {1}]
  %s11 = inlined_call_operand.hbm [shape: f32[2,8,128], index: 11, kind: output, shape index: {2}]
  %12 = xla_tuple %s9, %s10, %s11
  %s13 = sld [smem:[#allocation0]]
  $region105: #{tpu_custom_call.1} parent=0
    _
  %s15 = ssub.s32 1, %s13
  %s16 = scalar_select 0, %s15, %s13
  %18 = dma.hbm_to_smem %s0, 16, [#allocation3], [#allocation2]
  %19 = dma.done [#allocation2], 16
  %20 = sfence
  $region1: #{tpu_custom_call.1} parent=0
    #allocation4 [shape = 'u8[65536]{0}', space=vmem, size = 0x10000, scoped, tag = 'input window, operand 1']
    #allocation5 [shape = 's32[2]{0}', space=sflag, size = 0x8, scoped, tag = 'scoped memory for tpu_custom_call.1']
    #allocation6 [shape = 's32[2]{0}', space=sflag, size = 0x8, scoped, tag = 'scoped memory for tpu_custom_call.1']
    #allocation7 [shape = 'u8[131072]{0}', space=vmem, size = 0x20000, scoped, tag = 'input window, operand 2']
    #allocation8 [shape = 's32[2]{0}', space=sflag, size = 0x8, scoped, tag = 'scoped memory for tpu_custom_call.1']
    #allocation9 [shape = 'u8[65536]{0}', space=vmem, size = 0x10000, scoped, tag = 'input window, operand 3, single buffered']
    #allocation10 [shape = 'u8[65536]{0}', space=vmem, size = 0x10000, scoped, tag = 'input window, operand 4, single buffered']
    #allocation11 [shape = 's32[1]{0}', space=sflag, size = 0x4, scoped, tag = 'scoped memory for tpu_custom_call.1']
    #allocation12 [shape = 'u8[65536]{0}', space=vmem, size = 0x10000, scoped, tag = 'input window, operand 6, single buffered']
    #allocation13 [shape = 'u8[65536]{0}', space=vmem, size = 0x10000, scoped, tag = 'input window, operand 7, single buffered']
    #allocation14 [shape = 's32[1]{0}', space=sflag, size = 0x4, scoped, tag = 'scoped memory for tpu_custom_call.1']
    #allocation15 [shape = 'u8[131072]{0}', space=vmem, size = 0x20000, scoped, tag = 'output window, operand 0']
    #allocation16 [shape = 'u8[131072]{0}', space=vmem, size = 0x20000, scoped, tag = 'output window, operand 1']
    #allocation17 [shape = 's32[2]{0}', space=sflag, size = 0x8, scoped, tag = 'scoped memory for tpu_custom_call.1']
    #allocation18 [shape = 'u8[8192]{0}', space=vmem, size = 0x2000, scoped, tag = 'output window, operand 2']
    %21 = vsyncpa [#allocation5], 0
    %s22 = scalar_lea.sflag [#allocation5], 1
    %23 = vsyncpa %s22, 0
    %24 = vsyncpa [#allocation8], 0
    %s25 = scalar_lea.sflag [#allocation8], 1
    %26 = vsyncpa %s25, 0
    %27 = vsyncpa [#allocation11], 0
    %28 = vsyncpa [#allocation14], 0
    %29 = vsyncpa [#allocation6], 0
    %s30 = scalar_lea.sflag [#allocation6], 1
    %31 = vsyncpa %s30, 0
    %32 = vsyncpa [#allocation17], 0
    %s33 = scalar_lea.sflag [#allocation17], 1
    %34 = vsyncpa %s33, 0
    loop: start=0, step=1, limit=4
    $region2: #{tpu_custom_call.1} parent=1 // loop_pre_header
      _
    $region3: #{tpu_custom_call.1} parent=1 // loop_header
      %s36 = sphi 0, %s40
      %p37 = scmp.ge.s32.totalorder %s36, 4
      %s46 = sphi 0, %s48
      %s49 = sphi 0, %s46
      %s50 = sphi 0, %s49
      %s66 = sphi 0, %s50
      %s72 = sphi 0, %s74
      %s75 = sphi 0, %s72
      %s76 = sphi 0, %s75
      %s92 = sphi 0, %s76
      %s96 = sphi 0, %s96
      %s98 = sphi 0, %s96
      %s99 = sphi 0, %s98
      %s113 = sphi 0, %s99
      %s117 = sphi 0, %s117
      %s119 = sphi 0, %s117
      %s120 = sphi 0, %s119
      %s134 = sphi 0, %s120
      %s138 = sphi 0, %s138
      %s140 = sphi 0, %s138
      %s141 = sphi 0, %s140
      %s155 = sphi 0, %s141
      %s159 = sphi 0, %s159
      %s161 = sphi 0, %s159
      %s162 = sphi 0, %s161
      %s176 = sphi 0, %s162
      %s180 = sphi 0, %s180
      %s182 = sphi 0, %s180
      %s183 = sphi 0, %s182
      %s197 = sphi 0, %s183
      %s201 = sphi 0, %s201
      %s203 = sphi 0, %s201
      %s204 = sphi 0, %s203
      %s218 = sphi 0, %s204
      %s224 = sphi 0, %s226
      %s227 = sphi 0, %s224
      %s228 = sphi 0, %s227
      %s244 = sphi 0, %s228
      %s250 = sphi 0, %s252
      %s253 = sphi 0, %s250
      %s254 = sphi 0, %s253
      %s270 = sphi 0, %s254
      %s276 = sphi 0, %s278
      %s279 = sphi 0, %s276
      %s280 = sphi 0, %s279
      %s296 = sphi 0, %s280
    $region4: #{tpu_custom_call.1} parent=1 // loop_header_branch
      %39 = sbr.rel (%p37) target = $region8
    $region5: #{tpu_custom_call.1} parent=1 // loop_body
      %s41 = ssub.s32 %s36, 1
      %s42 = ssub.s32 %s36, 2
      %s43 = sadd.s32 %s36, 1
      %s44 = ssub.s32 %s36, %s43
      %p45 = scmp.eq.s32.totalorder %s44, 0
      %s47 = sadd.s32 %s46, 1
      %s48 = scalar_select %p45, %s46, %s47
      %p51 = pneg %p45
      %p52 = scmp.eq.s32.totalorder %s36, 1
      %p53 = por %p51, %p52
      %p54 = scmp.ne.s32.totalorder %s46, %s49
      %p55 = scmp.eq.s32.totalorder %s36, 0
      %p56 = por %p54, %p55
      %p57 = scmp.ne.s32.totalorder %s46, %s49
      %p58 = scmp.eq.s32.totalorder %s41, 1
      %p59 = por %p57, %p58
      %p60 = scmp.ne.s32.totalorder %s49, %s50
      %p61 = scmp.eq.s32.totalorder %s41, 0
      %p62 = por %p60, %p61
      %p63 = scmp.ne.s32.totalorder %s49, %s50
      %p64 = scmp.eq.s32.totalorder %s42, 1
      %p65 = por %p63, %p64
      %p67 = scmp.ne.s32.totalorder %s50, %s66
      %p68 = scmp.eq.s32.totalorder %s42, 0
      %p69 = por %p67, %p68
      %s70 = ssub.s32 %s36, %s43
      %p71 = scmp.eq.s32.totalorder %s70, 0
      %s73 = sadd.s32 %s72, 1
      %s74 = scalar_select %p71, %s72, %s73
      %p77 = pneg %p71
      %p78 = scmp.eq.s32.totalorder %s36, 1
      %p79 = por %p77, %p78
      %p80 = scmp.ne.s32.totalorder %s72, %s75
      %p81 = scmp.eq.s32.totalorder %s36, 0
      %p82 = por %p80, %p81
      %p83 = scmp.ne.s32.totalorder %s72, %s75
      %p84 = scmp.eq.s32.totalorder %s41, 1
      %p85 = por %p83, %p84
      %p86 = scmp.ne.s32.totalorder %s75, %s76
      %p87 = scmp.eq.s32.totalorder %s41, 0
      %p88 = por %p86, %p87
      %p89 = scmp.ne.s32.totalorder %s75, %s76
      %p90 = scmp.eq.s32.totalorder %s42, 1
      %p91 = por %p89, %p90
      %p93 = scmp.ne.s32.totalorder %s76, %s92
      %p94 = scmp.eq.s32.totalorder %s42, 0
      %p95 = por %p93, %p94
      %s97 = sadd.s32 %s96, 1
      %p100 = scmp.eq.s32.totalorder %s36, 1
      %p101 = scmp.ne.s32.totalorder %s96, %s98
      %p102 = scmp.eq.s32.totalorder %s36, 0
      %p103 = por %p101, %p102
      %p104 = scmp.ne.s32.totalorder %s96, %s98
      %p105 = scmp.eq.s32.totalorder %s41, 1
      %p106 = por %p104, %p105
      %p107 = scmp.ne.s32.totalorder %s98, %s99
      %p108 = scmp.eq.s32.totalorder %s41, 0
      %p109 = por %p107, %p108
      %p110 = scmp.ne.s32.totalorder %s98, %s99
      %p111 = scmp.eq.s32.totalorder %s42, 1
      %p112 = por %p110, %p111
      %p114 = scmp.ne.s32.totalorder %s99, %s113
      %p115 = scmp.eq.s32.totalorder %s42, 0
      %p116 = por %p114, %p115
      %s118 = sadd.s32 %s117, 1
      %p121 = scmp.eq.s32.totalorder %s36, 1
      %p122 = scmp.ne.s32.totalorder %s117, %s119
      %p123 = scmp.eq.s32.totalorder %s36, 0
      %p124 = por %p122, %p123
      %p125 = scmp.ne.s32.totalorder %s117, %s119
      %p126 = scmp.eq.s32.totalorder %s41, 1
      %p127 = por %p125, %p126
      %p128 = scmp.ne.s32.totalorder %s119, %s120
      %p129 = scmp.eq.s32.totalorder %s41, 0
      %p130 = por %p128, %p129
      %p131 = scmp.ne.s32.totalorder %s119, %s120
      %p132 = scmp.eq.s32.totalorder %s42, 1
      %p133 = por %p131, %p132
      %p135 = scmp.ne.s32.totalorder %s120, %s134
      %p136 = scmp.eq.s32.totalorder %s42, 0
      %p137 = por %p135, %p136
      %s139 = sadd.s32 %s138, 1
      %p142 = scmp.eq.s32.totalorder %s36, 1
      %p143 = scmp.ne.s32.totalorder %s138, %s140
      %p144 = scmp.eq.s32.totalorder %s36, 0
      %p145 = por %p143, %p144
      %p146 = scmp.ne.s32.totalorder %s138, %s140
      %p147 = scmp.eq.s32.totalorder %s41, 1
      %p148 = por %p146, %p147
      %p149 = scmp.ne.s32.totalorder %s140, %s141
      %p150 = scmp.eq.s32.totalorder %s41, 0
      %p151 = por %p149, %p150
      %p152 = scmp.ne.s32.totalorder %s140, %s141
      %p153 = scmp.eq.s32.totalorder %s42, 1
      %p154 = por %p152, %p153
      %p156 = scmp.ne.s32.totalorder %s141, %s155
      %p157 = scmp.eq.s32.totalorder %s42, 0
      %p158 = por %p156, %p157
      %s160 = sadd.s32 %s159, 1
      %p163 = scmp.eq.s32.totalorder %s36, 1
      %p164 = scmp.ne.s32.totalorder %s159, %s161
      %p165 = scmp.eq.s32.totalorder %s36, 0
      %p166 = por %p164, %p165
      %p167 = scmp.ne.s32.totalorder %s159, %s161
      %p168 = scmp.eq.s32.totalorder %s41, 1
      %p169 = por %p167, %p168
      %p170 = scmp.ne.s32.totalorder %s161, %s162
      %p171 = scmp.eq.s32.totalorder %s41, 0
      %p172 = por %p170, %p171
      %p173 = scmp.ne.s32.totalorder %s161, %s162
      %p174 = scmp.eq.s32.totalorder %s42, 1
      %p175 = por %p173, %p174
      %p177 = scmp.ne.s32.totalorder %s162, %s176
      %p178 = scmp.eq.s32.totalorder %s42, 0
      %p179 = por %p177, %p178
      %s181 = sadd.s32 %s180, 1
      %p184 = scmp.eq.s32.totalorder %s36, 1
      %p185 = scmp.ne.s32.totalorder %s180, %s182
      %p186 = scmp.eq.s32.totalorder %s36, 0
      %p187 = por %p185, %p186
      %p188 = scmp.ne.s32.totalorder %s180, %s182
      %p189 = scmp.eq.s32.totalorder %s41, 1
      %p190 = por %p188, %p189
      %p191 = scmp.ne.s32.totalorder %s182, %s183
      %p192 = scmp.eq.s32.totalorder %s41, 0
      %p193 = por %p191, %p192
      %p194 = scmp.ne.s32.totalorder %s182, %s183
      %p195 = scmp.eq.s32.totalorder %s42, 1
      %p196 = por %p194, %p195
      %p198 = scmp.ne.s32.totalorder %s183, %s197
      %p199 = scmp.eq.s32.totalorder %s42, 0
      %p200 = por %p198, %p199
      %s202 = sadd.s32 %s201, 1
      %p205 = scmp.eq.s32.totalorder %s36, 1
      %p206 = scmp.ne.s32.totalorder %s201, %s203
      %p207 = scmp.eq.s32.totalorder %s36, 0
      %p208 = por %p206, %p207
      %p209 = scmp.ne.s32.totalorder %s201, %s203
      %p210 = scmp.eq.s32.totalorder %s41, 1
      %p211 = por %p209, %p210
      %p212 = scmp.ne.s32.totalorder %s203, %s204
      %p213 = scmp.eq.s32.totalorder %s41, 0
      %p214 = por %p212, %p213
      %p215 = scmp.ne.s32.totalorder %s203, %s204
      %p216 = scmp.eq.s32.totalorder %s42, 1
      %p217 = por %p215, %p216
      %p219 = scmp.ne.s32.totalorder %s204, %s218
      %p220 = scmp.eq.s32.totalorder %s42, 0
      %p221 = por %p219, %p220
      %s222 = ssub.s32 %s36, %s43
      %p223 = scmp.eq.s32.totalorder %s222, 0
      %s225 = sadd.s32 %s224, 1
      %s226 = scalar_select %p223, %s224, %s225
      %p229 = pneg %p223
      %p230 = scmp.eq.s32.totalorder %s36, 1
      %p231 = por %p229, %p230
      %p232 = scmp.ne.s32.totalorder %s224, %s227
      %p233 = scmp.eq.s32.totalorder %s36, 0
      %p234 = por %p232, %p233
      %p235 = scmp.ne.s32.totalorder %s224, %s227
      %p236 = scmp.eq.s32.totalorder %s41, 1
      %p237 = por %p235, %p236
      %p238 = scmp.ne.s32.totalorder %s227, %s228
      %p239 = scmp.eq.s32.totalorder %s41, 0
      %p240 = por %p238, %p239
      %p241 = scmp.ne.s32.totalorder %s227, %s228
      %p242 = scmp.eq.s32.totalorder %s42, 1
      %p243 = por %p241, %p242
      %p245 = scmp.ne.s32.totalorder %s228, %s244
      %p246 = scmp.eq.s32.totalorder %s42, 0
      %p247 = por %p245, %p246
      %s248 = ssub.s32 %s36, %s43
      %p249 = scmp.eq.s32.totalorder %s248, 0
      %s251 = sadd.s32 %s250, 1
      %s252 = scalar_select %p249, %s250, %s251
      %p255 = pneg %p249
      %p256 = scmp.eq.s32.totalorder %s36, 1
      %p257 = por %p255, %p256
      %p258 = scmp.ne.s32.totalorder %s250, %s253
      %p259 = scmp.eq.s32.totalorder %s36, 0
      %p260 = por %p258, %p259
      %p261 = scmp.ne.s32.totalorder %s250, %s253
      %p262 = scmp.eq.s32.totalorder %s41, 1
      %p263 = por %p261, %p262
      %p264 = scmp.ne.s32.totalorder %s253, %s254
      %p265 = scmp.eq.s32.totalorder %s41, 0
      %p266 = por %p264, %p265
      %p267 = scmp.ne.s32.totalorder %s253, %s254
      %p268 = scmp.eq.s32.totalorder %s42, 1
      %p269 = por %p267, %p268
      %p271 = scmp.ne.s32.totalorder %s254, %s270
      %p272 = scmp.eq.s32.totalorder %s42, 0
      %p273 = por %p271, %p272
      %s274 = ssub.s32 %s36, %s43
      %p275 = scmp.eq.s32.totalorder %s274, 0
      %s277 = sadd.s32 %s276, 1
      %s278 = scalar_select %p275, %s276, %s277
      %p281 = pneg %p275
      %p282 = scmp.eq.s32.totalorder %s36, 1
      %p283 = por %p281, %p282
      %p284 = scmp.ne.s32.totalorder %s276, %s279
      %p285 = scmp.eq.s32.totalorder %s36, 0
      %p286 = por %p284, %p285
      %p287 = scmp.ne.s32.totalorder %s276, %s279
      %p288 = scmp.eq.s32.totalorder %s41, 1
      %p289 = por %p287, %p288
      %p290 = scmp.ne.s32.totalorder %s279, %s280
      %p291 = scmp.eq.s32.totalorder %s41, 0
      %p292 = por %p290, %p291
      %p293 = scmp.ne.s32.totalorder %s279, %s280
      %p294 = scmp.eq.s32.totalorder %s42, 1
      %p295 = por %p293, %p294
      %p297 = scmp.ne.s32.totalorder %s280, %s296
      %p298 = scmp.eq.s32.totalorder %s42, 0
      %p299 = por %p297, %p298
      %p300 = scmp.le.s32.totalorder 1, %s36
      %p301 = scmp.lt.s32.totalorder %s36, 3
      %p302 = pnand %p300, %p301
      %p303 = pneg %p302
      // Predicated region
      $region9: #{tpu_custom_call.1} parent=5 // pred_check
        _
      $region10: #{tpu_custom_call.1} parent=5 // pred_check_branch
        %305 = sbr.rel (%p302) target = $region12
      $region11: #{tpu_custom_call.1} parent=5 // pred_region
        %s306 = ssub.s32 %s36, 1
        // Predicated region
        $region13: #{tpu_custom_call.1} parent=11 // pred_check
          %p307 = pneg %p109
        $region14: #{tpu_custom_call.1} parent=11 // pred_check_branch
          %309 = sbr.rel (%p307) target = $region16
        $region15: #{tpu_custom_call.1} parent=11 // pred_region
          %s311 = ssub.s32 2048, 2048
          %312 = vsyncadd [#allocation8], %s311
          %s313 = sshll.u32 [#allocation9], 4
          %s314 = int_to_ptr.vmem [resolvable:$true] %s313
          %319 = dma.hbm_to_vmem [thread:$0]  %s3, 2048, %s314, [#allocation8], 128, 128, 8
        $region16: #{tpu_custom_call.1} parent=11 // pred_fallthru
          _
        // Predicated region
        $region17: #{tpu_custom_call.1} parent=11 // pred_check
          %p320 = pneg %p130
        $region18: #{tpu_custom_call.1} parent=11 // pred_check_branch
          %322 = sbr.rel (%p320) target = $region20
        $region19: #{tpu_custom_call.1} parent=11 // pred_region
          %s324 = ssub.s32 2048, 2048
          %325 = vsyncadd [#allocation11], %s324
          %s326 = sshll.u32 [#allocation10], 4
          %s327 = int_to_ptr.vmem [resolvable:$true] %s326
          %332 = dma.hbm_to_vmem [thread:$0]  %s4, 2048, %s327, [#allocation11], 128, 128, 8
        $region20: #{tpu_custom_call.1} parent=11 // pred_fallthru
          _
        // Predicated region
        $region21: #{tpu_custom_call.1} parent=11 // pred_check
          %p333 = pneg %p151
        $region22: #{tpu_custom_call.1} parent=11 // pred_check_branch
          %335 = sbr.rel (%p333) target = $region24
        $region23: #{tpu_custom_call.1} parent=11 // pred_region
          _
        $region24: #{tpu_custom_call.1} parent=11 // pred_fallthru
          _
        // Predicated region
        $region25: #{tpu_custom_call.1} parent=11 // pred_check
          %p336 = pneg %p172
        $region26: #{tpu_custom_call.1} parent=11 // pred_check_branch
          %338 = sbr.rel (%p336) target = $region28
        $region27: #{tpu_custom_call.1} parent=11 // pred_region
          %s340 = ssub.s32 2048, 2048
          %341 = vsyncadd [#allocation11], %s340
          %s342 = sshll.u32 [#allocation12], 4
          %s343 = int_to_ptr.vmem [resolvable:$true] %s342
          %348 = dma.hbm_to_vmem [thread:$0]  %s6, 2048, %s343, [#allocation11], 128, 128, 8
        $region28: #{tpu_custom_call.1} parent=11 // pred_fallthru
          _
        // Predicated region
        $region29: #{tpu_custom_call.1} parent=11 // pred_check
          %p349 = pneg %p193
        $region30: #{tpu_custom_call.1} parent=11 // pred_check_branch
          %351 = sbr.rel (%p349) target = $region32
        $region31: #{tpu_custom_call.1} parent=11 // pred_region
          %s353 = ssub.s32 2048, 2048
          %354 = vsyncadd [#allocation14], %s353
          %s355 = sshll.u32 [#allocation13], 4
          %s356 = int_to_ptr.vmem [resolvable:$true] %s355
          %361 = dma.hbm_to_vmem [thread:$0]  %s7, 2048, %s356, [#allocation14], 128, 128, 8
        $region32: #{tpu_custom_call.1} parent=11 // pred_fallthru
          _
        // Predicated region
        $region33: #{tpu_custom_call.1} parent=11 // pred_check
          %p362 = pneg %p214
        $region34: #{tpu_custom_call.1} parent=11 // pred_check_branch
          %364 = sbr.rel (%p362) target = $region36
        $region35: #{tpu_custom_call.1} parent=11 // pred_region
          _
        $region36: #{tpu_custom_call.1} parent=11 // pred_fallthru
          _
      $region12: #{tpu_custom_call.1} parent=5 // pred_fallthru
        _
      %p365 = scmp.lt.s32.totalorder %s36, 2
      // Predicated region
      $region37: #{tpu_custom_call.1} parent=5 // pred_check
        %p366 = pneg %p365
      $region38: #{tpu_custom_call.1} parent=5 // pred_check_branch
        %368 = sbr.rel (%p366) target = $region40
      $region39: #{tpu_custom_call.1} parent=5 // pred_region
        // Predicated region
        $region41: #{tpu_custom_call.1} parent=39 // pred_check
          %p369 = pneg %p56
        $region42: #{tpu_custom_call.1} parent=39 // pred_check_branch
          %371 = sbr.rel (%p369) target = $region44
        $region43: #{tpu_custom_call.1} parent=39 // pred_region
          %s372 = sand.u32 %s46, 1
          %s373 = scalar_lea.sflag [#allocation5], %s372
          %s374 = sand.u32 %s46, 1
          %s375 = smul.addr %s374, 64
          %s376 = scalar_lea.vmem [#allocation4], %s375
          %s378 = ssub.s32 1024, 1024
          %379 = vsyncadd %s373, %s378
          %s380 = smul.addr %s36, 16
          %s381 = smul.addr %s380, 64
          %s382 = scalar_lea.hbm %s1, %s381
          %s383 = sshll.u32 %s376, 4
          %s384 = int_to_ptr.vmem [resolvable:$true] %s383
          %389 = dma.hbm_to_vmem [thread:$0]  %s382, 1024, %s384, %s373, 64, 64, 4
        $region44: #{tpu_custom_call.1} parent=39 // pred_fallthru
          _
        // Predicated region
        $region45: #{tpu_custom_call.1} parent=39 // pred_check
          %p390 = pneg %p82
        $region46: #{tpu_custom_call.1} parent=39 // pred_check_branch
          %392 = sbr.rel (%p390) target = $region48
        $region47: #{tpu_custom_call.1} parent=39 // pred_region
          %s393 = sand.u32 %s36, 1
          %s394 = scalar_lea.sflag [#allocation8], %s393
          %s395 = sand.u32 %s72, 1
          %s396 = smul.addr %s395, 128
          %s397 = scalar_lea.vmem [#allocation7], %s396
          %s399 = ssub.s32 2048, 2048
          %400 = vsyncadd %s394, %s399
          %s401 = smul.addr %s36, 16
          %s402 = smul.addr %s401, 128
          %s403 = scalar_lea.hbm %s2, %s402
          %s404 = sshll.u32 %s397, 4
          %s405 = int_to_ptr.vmem [resolvable:$true] %s404
          %410 = dma.hbm_to_vmem [thread:$0]  %s403, 2048, %s405, %s394, 128, 128, 8
        $region48: #{tpu_custom_call.1} parent=39 // pred_fallthru
          _
      $region40: #{tpu_custom_call.1} parent=5 // pred_fallthru
        _
      %p411 = scmp.le.s32.totalorder 1, %s36
      %p412 = scmp.lt.s32.totalorder %s36, 3
      %p413 = pnand %p411, %p412
      %p414 = pneg %p413
      // Predicated region
      $region49: #{tpu_custom_call.1} parent=5 // pred_check
        _
      $region50: #{tpu_custom_call.1} parent=5 // pred_check_branch
        %416 = sbr.rel (%p413) target = $region52
      $region51: #{tpu_custom_call.1} parent=5 // pred_region
        %s417 = ssub.s32 %s36, 1
        %s418 = sand.u32 %s49, 1
        %s419 = scalar_lea.sflag [#allocation5], %s418
        %s420 = sand.u32 %s49, 1
        %s421 = smul.addr %s420, 64
        %s422 = scalar_lea.vmem [#allocation4], %s421
        // Predicated region
        $region53: #{tpu_custom_call.1} parent=51 // pred_check
          %p423 = pneg %p62
        $region54: #{tpu_custom_call.1} parent=51 // pred_check_branch
          %425 = sbr.rel (%p423) target = $region56
        $region55: #{tpu_custom_call.1} parent=51 // pred_region
          %426 = dma.done %s419, 1024
        $region56: #{tpu_custom_call.1} parent=51 // pred_fallthru
          _
        %s427 = sand.u32 %s41, 1
        %s428 = scalar_lea.sflag [#allocation8], %s427
        %s429 = sand.u32 %s75, 1
        %s430 = smul.addr %s429, 128
        %s431 = scalar_lea.vmem [#allocation7], %s430
        // Predicated region
        $region57: #{tpu_custom_call.1} parent=51 // pred_check
          %p432 = pneg %p88
        $region58: #{tpu_custom_call.1} parent=51 // pred_check_branch
          %434 = sbr.rel (%p432) target = $region60
        $region59: #{tpu_custom_call.1} parent=51 // pred_region
          %435 = dma.done %s428, 2048
        $region60: #{tpu_custom_call.1} parent=51 // pred_fallthru
          _
        // Predicated region
        $region61: #{tpu_custom_call.1} parent=51 // pred_check
          %p436 = pneg %p109
        $region62: #{tpu_custom_call.1} parent=51 // pred_check_branch
          %438 = sbr.rel (%p436) target = $region64
        $region63: #{tpu_custom_call.1} parent=51 // pred_region
          %439 = dma.done [#allocation8], 2048
        $region64: #{tpu_custom_call.1} parent=51 // pred_fallthru
          _
        // Predicated region
        $region65: #{tpu_custom_call.1} parent=51 // pred_check
          %p440 = pneg %p130
        $region66: #{tpu_custom_call.1} parent=51 // pred_check_branch
          %442 = sbr.rel (%p440) target = $region68
        $region67: #{tpu_custom_call.1} parent=51 // pred_region
          %443 = dma.done [#allocation11], 2048
        $region68: #{tpu_custom_call.1} parent=51 // pred_fallthru
          _
        // Predicated region
        $region69: #{tpu_custom_call.1} parent=51 // pred_check
          %p444 = pneg %p172
        $region70: #{tpu_custom_call.1} parent=51 // pred_check_branch
          %446 = sbr.rel (%p444) target = $region72
        $region71: #{tpu_custom_call.1} parent=51 // pred_region
          %447 = dma.done [#allocation11], 2048
        $region72: #{tpu_custom_call.1} parent=51 // pred_fallthru
          _
        // Predicated region
        $region73: #{tpu_custom_call.1} parent=51 // pred_check
          %p448 = pneg %p193
        $region74: #{tpu_custom_call.1} parent=51 // pred_check_branch
          %450 = sbr.rel (%p448) target = $region76
        $region75: #{tpu_custom_call.1} parent=51 // pred_region
          %451 = dma.done [#allocation14], 2048
        $region76: #{tpu_custom_call.1} parent=51 // pred_fallthru
          _
        %s452 = sand.u32 %s49, 1
        %s453 = scalar_lea.sflag [#allocation5], %s452
        %s454 = sand.u32 %s49, 1
        %s455 = smul.addr %s454, 64
        %s456 = scalar_lea.vmem [#allocation4], %s455
        %p457 = pneg %p62
        %p458 = pneg %p59
        %s459 = sand.u32 %s41, 1
        %s460 = scalar_lea.sflag [#allocation8], %s459
        %s461 = sand.u32 %s75, 1
        %s462 = smul.addr %s461, 128
        %s463 = scalar_lea.vmem [#allocation7], %s462
        %p464 = pneg %p88
        %p465 = pneg %p85
        %p466 = pneg %p109
        %p467 = pneg %p106
        %p468 = pneg %p130
        %p469 = pneg %p127
        %p470 = pneg %p151
        %p471 = pneg %p148
        %p472 = pneg %p172
        %p473 = pneg %p169
        %p474 = pneg %p193
        %p475 = pneg %p190
        %p476 = pneg %p214
        %p477 = pneg %p211
        %p478 = pneg %p240
        %p479 = pneg %p237
        %s480 = sand.u32 %s227, 1
        %s481 = scalar_lea.sflag [#allocation6], %s480
        %s482 = sand.u32 %s227, 1
        %s483 = smul.addr %s482, 128
        %s484 = scalar_lea.vmem [#allocation15], %s483
        %p485 = pneg %p266
        %p486 = pneg %p263
        %s487 = sand.u32 %s41, 1
        %s488 = scalar_lea.sflag [#allocation17], %s487
        %s489 = sand.u32 %s253, 1
        %s490 = smul.addr %s489, 128
        %s491 = scalar_lea.vmem [#allocation16], %s490
        %p492 = pneg %p292
        %p493 = pneg %p289
        %s494 = sand.u32 %s41, 1
        %s495 = scalar_lea.sflag [#allocation17], %s494
        %s496 = sand.u32 %s279, 1
        %s497 = smul.addr %s496, 8
        %s498 = scalar_lea.vmem [#allocation18], %s497
        %s500 = sld [smem:[#allocation3 + %s41]]
        %v501 = vld [vmem:[%s422] sm:$0xf]
        %v502 = vld [vmem:[%s422 + $0x4] sm:$0xf]
        %v503 = vld [vmem:[%s422 + $0x8] sm:$0xf]
        %v504 = vld [vmem:[%s422 + $0xc] sm:$0xf]
        %v505 = vld [vmem:[%s422 + $0x10] sm:$0xf]
        %v506 = vld [vmem:[%s422 + $0x14] sm:$0xf]
        %v507 = vld [vmem:[%s422 + $0x18] sm:$0xf]
        %v508 = vld [vmem:[%s422 + $0x1c] sm:$0xf]
        %v509 = vld [vmem:[%s422 + $0x20] sm:$0xf]
        %v510 = vld [vmem:[%s422 + $0x24] sm:$0xf]
        %v511 = vld [vmem:[%s422 + $0x28] sm:$0xf]
        %v512 = vld [vmem:[%s422 + $0x2c] sm:$0xf]
        %v513 = vld [vmem:[%s422 + $0x30] sm:$0xf]
        %v514 = vld [vmem:[%s422 + $0x34] sm:$0xf]
        %v515 = vld [vmem:[%s422 + $0x38] sm:$0xf]
        %v516 = vld [vmem:[%s422 + $0x3c] sm:$0xf]
        %v517 = vld [vmem:[%s431] sm:$0xff]
        %v518 = vld [vmem:[%s431 + $0x8] sm:$0xff]
        %v519 = vld [vmem:[%s431 + $0x10] sm:$0xff]
        %v520 = vld [vmem:[%s431 + $0x18] sm:$0xff]
        %v521 = vld [vmem:[%s431 + $0x20] sm:$0xff]
        %v522 = vld [vmem:[%s431 + $0x28] sm:$0xff]
        %v523 = vld [vmem:[%s431 + $0x30] sm:$0xff]
        %v524 = vld [vmem:[%s431 + $0x38] sm:$0xff]
        %v525 = vld [vmem:[%s431 + $0x40] sm:$0xff]
        %v526 = vld [vmem:[%s431 + $0x48] sm:$0xff]
        %v527 = vld [vmem:[%s431 + $0x50] sm:$0xff]
        %v528 = vld [vmem:[%s431 + $0x58] sm:$0xff]
        %v529 = vld [vmem:[%s431 + $0x60] sm:$0xff]
        %v530 = vld [vmem:[%s431 + $0x68] sm:$0xff]
        %v531 = vld [vmem:[%s431 + $0x70] sm:$0xff]
        %v532 = vld [vmem:[%s431 + $0x78] sm:$0xff]
        %v533 = vunpack.c.l.bf16 %v501
        %v534 = vunpack.c.l.bf16 %v502
        %v535 = vunpack.c.l.bf16 %v503
        %v536 = vunpack.c.l.bf16 %v504
        %v537 = vunpack.c.l.bf16 %v505
        %v538 = vunpack.c.l.bf16 %v506
        %v539 = vunpack.c.l.bf16 %v507
        %v540 = vunpack.c.l.bf16 %v508
        %v541 = vunpack.c.l.bf16 %v509
        %v542 = vunpack.c.l.bf16 %v510
        %v543 = vunpack.c.l.bf16 %v511
        %v544 = vunpack.c.l.bf16 %v512
        %v545 = vunpack.c.l.bf16 %v513
        %v546 = vunpack.c.l.bf16 %v514
        %v547 = vunpack.c.l.bf16 %v515
        %v548 = vunpack.c.l.bf16 %v516
        %549 = vadd.xlane.f32.xlu0 %v533
        %v550 = vpop.xlane.xlu0 %549
        %551 = vadd.xlane.f32.xlu0 %v534
        %v552 = vpop.xlane.xlu0 %551
        %553 = vadd.xlane.f32.xlu0 %v535
        %v554 = vpop.xlane.xlu0 %553
        %555 = vadd.xlane.f32.xlu0 %v536
        %v556 = vpop.xlane.xlu0 %555
        %557 = vadd.xlane.f32.xlu0 %v537
        %v558 = vpop.xlane.xlu0 %557
        %559 = vadd.xlane.f32.xlu0 %v538
        %v560 = vpop.xlane.xlu0 %559
        %561 = vadd.xlane.f32.xlu0 %v539
        %v562 = vpop.xlane.xlu0 %561
        %563 = vadd.xlane.f32.xlu0 %v540
        %v564 = vpop.xlane.xlu0 %563
        %565 = vadd.xlane.f32.xlu0 %v541
        %v566 = vpop.xlane.xlu0 %565
        %567 = vadd.xlane.f32.xlu0 %v542
        %v568 = vpop.xlane.xlu0 %567
        %569 = vadd.xlane.f32.xlu0 %v543
        %v570 = vpop.xlane.xlu0 %569
        %571 = vadd.xlane.f32.xlu0 %v544
        %v572 = vpop.xlane.xlu0 %571
        %573 = vadd.xlane.f32.xlu0 %v545
        %v574 = vpop.xlane.xlu0 %573
        %575 = vadd.xlane.f32.xlu0 %v546
        %v576 = vpop.xlane.xlu0 %575
        %577 = vadd.xlane.f32.xlu0 %v547
        %v578 = vpop.xlane.xlu0 %577
        %579 = vadd.xlane.f32.xlu0 %v548
        %v580 = vpop.xlane.xlu0 %579
        %v581 = vpack.c.bf16 %v518, %v517
        %v582 = vpack.c.bf16 %v520, %v519
        %v583 = vpack.c.bf16 %v522, %v521
        %v584 = vpack.c.bf16 %v524, %v523
        %v585 = vpack.c.bf16 %v526, %v525
        %v586 = vpack.c.bf16 %v528, %v527
        %v587 = vpack.c.bf16 %v530, %v529
        %v588 = vpack.c.bf16 %v532, %v531
        %v605 = vunpack.c.l.b16 %v501
        %v606 = vunpack.c.l.b16 %v502
        %v607 = vunpack.c.l.b16 %v503
        %v608 = vunpack.c.l.b16 %v504
        %v609 = vunpack.c.l.b16 %v505
        %v610 = vunpack.c.l.b16 %v506
        %v611 = vunpack.c.l.b16 %v507
        %v612 = vunpack.c.l.b16 %v508
        %v613 = vunpack.c.l.b16 %v509
        %v614 = vunpack.c.l.b16 %v510
        %v615 = vunpack.c.l.b16 %v511
        %v616 = vunpack.c.l.b16 %v512
        %v617 = vunpack.c.l.b16 %v513
        %v618 = vunpack.c.l.b16 %v514
        %v619 = vunpack.c.l.b16 %v515
        %v620 = vunpack.c.l.b16 %v516
        %v621 = vpack.c.b16 %v606, %v605
        %v622 = vpack.c.b16 %v608, %v607
        %v623 = vpack.c.b16 %v610, %v609
        %v624 = vpack.c.b16 %v612, %v611
        %v625 = vpack.c.b16 %v614, %v613
        %v626 = vpack.c.b16 %v616, %v615
        %v627 = vpack.c.b16 %v618, %v617
        %v628 = vpack.c.b16 %v620, %v619
        %637 = vmatprep.subr.bf16.mxu0 0
        %638 = vmatpush1.bf16.msra.mxu0 %v581
        %639 = vmatprep.subr.bf16.mxu0 0
        %640 = vmatpush1.bf16.msra.mxu0 %v582
        %641 = vmatprep.subr.bf16.mxu0 0
        %642 = vmatpush1.bf16.msra.mxu0 %v583
        %643 = vmatprep.subr.bf16.mxu0 0
        %644 = vmatpush1.bf16.msra.mxu0 %v584
        %645 = vmatprep.subr.bf16.mxu0 0
        %646 = vmatpush1.bf16.msra.mxu0 %v585
        %647 = vmatprep.subr.bf16.mxu0 0
        %648 = vmatpush1.bf16.msra.mxu0 %v586
        %649 = vmatprep.subr.bf16.mxu0 0
        %650 = vmatpush1.bf16.msra.mxu0 %v587
        %651 = vmatprep.subr.bf16.mxu0 0
        %652 = vmatpush1.bf16.msra.mxu0 %v588
        %653 = vmatprep.subr.bf16.mxu0 0
        %654 = vmatpush1.bf16.msra.mxu0 0
        %655 = vmatprep.subr.bf16.mxu0 0
        %656 = vmatpush1.bf16.msra.mxu0 0
        %657 = vmatprep.subr.bf16.mxu0 0
        %658 = vmatpush1.bf16.msra.mxu0 0
        %659 = vmatprep.subr.bf16.mxu0 0
        %660 = vmatpush1.bf16.msra.mxu0 0
        %661 = vmatprep.subr.bf16.mxu0 0
        %662 = vmatpush1.bf16.msra.mxu0 0
        %663 = vmatprep.subr.bf16.mxu0 0
        %664 = vmatpush1.bf16.msra.mxu0 0
        %665 = vmatprep.subr.bf16.mxu0 0
        %666 = vmatpush1.bf16.msra.mxu0 0
        %667 = vmatprep.subr.bf16.mxu0 0
        %668 = vmatpush1.bf16.msra.mxu0 0
        %669 = vmatprep.mubr.bf16.mxu0 0
        %670 = vmatmul.mubr.bf16.gmra.mrb[0].mxu0 %v621
        %v671 = vpop.f32.mrb[0].mxu0
        %v672 = vadd.f32 0.0, %v671
        %v673 = vpop.f32.mrb[0].mxu0
        %v674 = vpop.f32.mrb[0].mxu0
        %v675 = vadd.f32 0.0, %v674
        %v676 = vpop.f32.mrb[0].mxu0
        %677 = vmatprep.mubr.bf16.mxu0 0
        %678 = vmatmul.mubr.bf16.gmra.mrb[0].mxu0 %v622
        %v679 = vpop.f32.mrb[0].mxu0
        %v680 = vadd.f32 0.0, %v679
        %v681 = vpop.f32.mrb[0].mxu0
        %v682 = vpop.f32.mrb[0].mxu0
        %v683 = vadd.f32 0.0, %v682
        %v684 = vpop.f32.mrb[0].mxu0
        %685 = vmatprep.mubr.bf16.mxu0 0
        %686 = vmatmul.mubr.bf16.gmra.mrb[0].mxu0 %v623
        %v687 = vpop.f32.mrb[0].mxu0
        %v688 = vadd.f32 0.0, %v687
        %v689 = vpop.f32.mrb[0].mxu0
        %v690 = vpop.f32.mrb[0].mxu0
        %v691 = vadd.f32 0.0, %v690
        %v692 = vpop.f32.mrb[0].mxu0
        %693 = vmatprep.mubr.bf16.mxu0 0
        %694 = vmatmul.mubr.bf16.gmra.mrb[0].mxu0 %v624
        %v695 = vpop.f32.mrb[0].mxu0
        %v696 = vadd.f32 0.0, %v695
        %v697 = vpop.f32.mrb[0].mxu0
        %v698 = vpop.f32.mrb[0].mxu0
        %v699 = vadd.f32 0.0, %v698
        %v700 = vpop.f32.mrb[0].mxu0
        %701 = vmatprep.mubr.bf16.mxu0 0
        %702 = vmatmul.mubr.bf16.gmra.mrb[0].mxu0 %v625
        %v703 = vpop.f32.mrb[0].mxu0
        %v704 = vadd.f32 0.0, %v703
        %v705 = vpop.f32.mrb[0].mxu0
        %v706 = vpop.f32.mrb[0].mxu0
        %v707 = vadd.f32 0.0, %v706
        %v708 = vpop.f32.mrb[0].mxu0
        %709 = vmatprep.mubr.bf16.mxu0 0
        %710 = vmatmul.mubr.bf16.gmra.mrb[0].mxu0 %v626
        %v711 = vpop.f32.mrb[0].mxu0
        %v712 = vadd.f32 0.0, %v711
        %v713 = vpop.f32.mrb[0].mxu0
        %v714 = vpop.f32.mrb[0].mxu0
        %v715 = vadd.f32 0.0, %v714
        %v716 = vpop.f32.mrb[0].mxu0
        %717 = vmatprep.mubr.bf16.mxu0 0
        %718 = vmatmul.mubr.bf16.gmra.mrb[0].mxu0 %v627
        %v719 = vpop.f32.mrb[0].mxu0
        %v720 = vadd.f32 0.0, %v719
        %v721 = vpop.f32.mrb[0].mxu0
        %v722 = vpop.f32.mrb[0].mxu0
        %v723 = vadd.f32 0.0, %v722
        %v724 = vpop.f32.mrb[0].mxu0
        %725 = vmatprep.mubr.bf16.mxu0 0
        %726 = vmatmul.mubr.bf16.gmra.mrb[0].mxu0 %v628
        %v727 = vpop.f32.mrb[0].mxu0
        %v728 = vadd.f32 0.0, %v727
        %v729 = vpop.f32.mrb[0].mxu0
        %v730 = vpop.f32.mrb[0].mxu0
        %v731 = vadd.f32 0.0, %v730
        %v732 = vpop.f32.mrb[0].mxu0
        %733 = vdwg.mxu0
        %v734 = vmax.f32 %v550, 1.0
        %v735 = vmax.f32 %v552, 1.0
        %v736 = vmax.f32 %v554, 1.0
        %v737 = vmax.f32 %v556, 1.0
        %v738 = vmax.f32 %v558, 1.0
        %v739 = vmax.f32 %v560, 1.0
        %v740 = vmax.f32 %v562, 1.0
        %v741 = vmax.f32 %v564, 1.0
        %v742 = vmax.f32 %v566, 1.0
        %v743 = vmax.f32 %v568, 1.0
        %v744 = vmax.f32 %v570, 1.0
        %v745 = vmax.f32 %v572, 1.0
        %v746 = vmax.f32 %v574, 1.0
        %v747 = vmax.f32 %v576, 1.0
        %v748 = vmax.f32 %v578, 1.0
        %v749 = vmax.f32 %v580, 1.0
        %v750 = vrcp.pop %v734
        %v751 = vrcp.pop %v735
        %v752 = vrcp.pop %v736
        %v753 = vrcp.pop %v737
        %v754 = vrcp.pop %v738
        %v755 = vrcp.pop %v739
        %v756 = vrcp.pop %v740
        %v757 = vrcp.pop %v741
        %v758 = vrcp.pop %v742
        %v759 = vrcp.pop %v743
        %v760 = vrcp.pop %v744
        %v761 = vrcp.pop %v745
        %v762 = vrcp.pop %v746
        %v763 = vrcp.pop %v747
        %v764 = vrcp.pop %v748
        %v765 = vrcp.pop %v749
        %v766 = vmul.f32 %v672, %v750
        %v767 = vmul.f32 %v675, %v751
        %v768 = vmul.f32 %v680, %v752
        %v769 = vmul.f32 %v683, %v753
        %v770 = vmul.f32 %v688, %v754
        %v771 = vmul.f32 %v691, %v755
        %v772 = vmul.f32 %v696, %v756
        %v773 = vmul.f32 %v699, %v757
        %v774 = vmul.f32 %v704, %v758
        %v775 = vmul.f32 %v707, %v759
        %v776 = vmul.f32 %v712, %v760
        %v777 = vmul.f32 %v715, %v761
        %v778 = vmul.f32 %v720, %v762
        %v779 = vmul.f32 %v723, %v763
        %v780 = vmul.f32 %v728, %v764
        %v781 = vmul.f32 %v731, %v765
        %v782 = vld [vmem:[#allocation9] sm:$0xff]
        %v783 = vld [vmem:[#allocation9 + $0x8] sm:$0xff]
        %v784 = vld [vmem:[#allocation9 + $0x10] sm:$0xff]
        %v785 = vld [vmem:[#allocation9 + $0x18] sm:$0xff]
        %v786 = vld [vmem:[#allocation9 + $0x20] sm:$0xff]
        %v787 = vld [vmem:[#allocation9 + $0x28] sm:$0xff]
        %v788 = vld [vmem:[#allocation9 + $0x30] sm:$0xff]
        %v789 = vld [vmem:[#allocation9 + $0x38] sm:$0xff]
        %v790 = vld [vmem:[#allocation9 + $0x40] sm:$0xff]
        %v791 = vld [vmem:[#allocation9 + $0x48] sm:$0xff]
        %v792 = vld [vmem:[#allocation9 + $0x50] sm:$0xff]
        %v793 = vld [vmem:[#allocation9 + $0x58] sm:$0xff]
        %v794 = vld [vmem:[#allocation9 + $0x60] sm:$0xff]
        %v795 = vld [vmem:[#allocation9 + $0x68] sm:$0xff]
        %v796 = vld [vmem:[#allocation9 + $0x70] sm:$0xff]
        %v797 = vld [vmem:[#allocation9 + $0x78] sm:$0xff]
        %v798 = vld [vmem:[#allocation10] sm:$0xff]
        %v799 = vld [vmem:[#allocation10 + $0x8] sm:$0xff]
        %v800 = vld [vmem:[#allocation10 + $0x10] sm:$0xff]
        %v801 = vld [vmem:[#allocation10 + $0x18] sm:$0xff]
        %v802 = vld [vmem:[#allocation10 + $0x20] sm:$0xff]
        %v803 = vld [vmem:[#allocation10 + $0x28] sm:$0xff]
        %v804 = vld [vmem:[#allocation10 + $0x30] sm:$0xff]
        %v805 = vld [vmem:[#allocation10 + $0x38] sm:$0xff]
        %v806 = vld [vmem:[#allocation10 + $0x40] sm:$0xff]
        %v807 = vld [vmem:[#allocation10 + $0x48] sm:$0xff]
        %v808 = vld [vmem:[#allocation10 + $0x50] sm:$0xff]
        %v809 = vld [vmem:[#allocation10 + $0x58] sm:$0xff]
        %v810 = vld [vmem:[#allocation10 + $0x60] sm:$0xff]
        %v811 = vld [vmem:[#allocation10 + $0x68] sm:$0xff]
        %v812 = vld [vmem:[#allocation10 + $0x70] sm:$0xff]
        %v813 = vld [vmem:[#allocation10 + $0x78] sm:$0xff]
        %814 = vmatprep.subr.mxu0 0.0
        %815 = vmatpush1.msra.mxu0 %v798
        %816 = vmatprep.subr.mxu0 0.0
        %817 = vmatpush1.msra.mxu0 %v799
        %818 = vmatprep.subr.mxu0 0.0
        %819 = vmatpush1.msra.mxu0 %v800
        %820 = vmatprep.subr.mxu0 0.0
        %821 = vmatpush1.msra.mxu0 %v801
        %822 = vmatprep.subr.mxu0 0.0
        %823 = vmatpush1.msra.mxu0 %v802
        %824 = vmatprep.subr.mxu0 0.0
        %825 = vmatpush1.msra.mxu0 %v803
        %826 = vmatprep.subr.mxu0 0.0
        %827 = vmatpush1.msra.mxu0 %v804
        %828 = vmatprep.subr.mxu0 0.0
        %829 = vmatpush1.msra.mxu0 %v805
        %830 = vmatprep.subr.mxu0 0.0
        %831 = vmatpush1.msra.mxu0 %v806
        %832 = vmatprep.subr.mxu0 0.0
        %833 = vmatpush1.msra.mxu0 %v807
        %834 = vmatprep.subr.mxu0 0.0
        %835 = vmatpush1.msra.mxu0 %v808
        %836 = vmatprep.subr.mxu0 0.0
        %837 = vmatpush1.msra.mxu0 %v809
        %838 = vmatprep.subr.mxu0 0.0
        %839 = vmatpush1.msra.mxu0 %v810
        %840 = vmatprep.subr.mxu0 0.0
        %841 = vmatpush1.msra.mxu0 %v811
        %842 = vmatprep.subr.mxu0 0.0
        %843 = vmatpush1.msra.mxu0 %v812
        %844 = vmatprep.subr.mxu0 0.0
        %845 = vmatpush1.msra.mxu0 %v813
        %846 = vmatprep.subr.mxu0 0.0
        %847 = vmatpush1.msra.mxu0 0.0
        %848 = vmatprep.subr.mxu0 0.0
        %849 = vmatpush1.msra.mxu0 0.0
        %850 = vmatprep.subr.mxu0 0.0
        %851 = vmatpush1.msra.mxu0 0.0
        %852 = vmatprep.subr.mxu0 0.0
        %853 = vmatpush1.msra.mxu0 0.0
        %854 = vmatprep.subr.mxu0 0.0
        %855 = vmatpush1.msra.mxu0 0.0
        %856 = vmatprep.subr.mxu0 0.0
        %857 = vmatpush1.msra.mxu0 0.0
        %858 = vmatprep.subr.mxu0 0.0
        %859 = vmatpush1.msra.mxu0 0.0
        %860 = vmatprep.subr.mxu0 0.0
        %861 = vmatpush1.msra.mxu0 0.0
        %862 = vmatprep.subr.mxu0 0.0
        %863 = vmatpush1.msra.mxu0 0.0
        %864 = vmatprep.subr.mxu0 0.0
        %865 = vmatpush1.msra.mxu0 0.0
        %866 = vmatprep.subr.mxu0 0.0
        %867 = vmatpush1.msra.mxu0 0.0
        %868 = vmatprep.subr.mxu0 0.0
        %869 = vmatpush1.msra.mxu0 0.0
        %870 = vmatprep.subr.mxu0 0.0
        %871 = vmatpush1.msra.mxu0 0.0
        %872 = vmatprep.subr.mxu0 0.0
        %873 = vmatpush1.msra.mxu0 0.0
        %874 = vmatprep.subr.mxu0 0.0
        %875 = vmatpush1.msra.mxu0 0.0
        %876 = vmatprep.subr.mxu0 0.0
        %877 = vmatpush1.msra.mxu0 0.0
        %878 = vmatprep.mubr.f32.mxu0 0.0
        %879 = vmatmul.mubr.f32.gmra.mrb[0].mxu0 %v766
        %v880 = vpop.f32.mrb[0].mxu0
        %v881 = vadd.f32 0.0, %v880
        %v882 = vpop.f32.mrb[0].mxu0
        %883 = vmatprep.mubr.f32.mxu0 0.0
        %884 = vmatmul.mubr.f32.gmra.mrb[0].mxu0 %v767
        %v885 = vpop.f32.mrb[0].mxu0
        %v886 = vadd.f32 0.0, %v885
        %v887 = vpop.f32.mrb[0].mxu0
        %888 = vmatprep.mubr.f32.mxu0 0.0
        %889 = vmatmul.mubr.f32.gmra.mrb[0].mxu0 %v768
        %v890 = vpop.f32.mrb[0].mxu0
        %v891 = vadd.f32 0.0, %v890
        %v892 = vpop.f32.mrb[0].mxu0
        %893 = vmatprep.mubr.f32.mxu0 0.0
        %894 = vmatmul.mubr.f32.gmra.mrb[0].mxu0 %v769
        %v895 = vpop.f32.mrb[0].mxu0
        %v896 = vadd.f32 0.0, %v895
        %v897 = vpop.f32.mrb[0].mxu0
        %898 = vmatprep.mubr.f32.mxu0 0.0
        %899 = vmatmul.mubr.f32.gmra.mrb[0].mxu0 %v770
        %v900 = vpop.f32.mrb[0].mxu0
        %v901 = vadd.f32 0.0, %v900
        %v902 = vpop.f32.mrb[0].mxu0
        %903 = vmatprep.mubr.f32.mxu0 0.0
        %904 = vmatmul.mubr.f32.gmra.mrb[0].mxu0 %v771
        %v905 = vpop.f32.mrb[0].mxu0
        %v906 = vadd.f32 0.0, %v905
        %v907 = vpop.f32.mrb[0].mxu0
        %908 = vmatprep.mubr.f32.mxu0 0.0
        %909 = vmatmul.mubr.f32.gmra.mrb[0].mxu0 %v772
        %v910 = vpop.f32.mrb[0].mxu0
        %v911 = vadd.f32 0.0, %v910
        %v912 = vpop.f32.mrb[0].mxu0
        %913 = vmatprep.mubr.f32.mxu0 0.0
        %914 = vmatmul.mubr.f32.gmra.mrb[0].mxu0 %v773
        %v915 = vpop.f32.mrb[0].mxu0
        %v916 = vadd.f32 0.0, %v915
        %v917 = vpop.f32.mrb[0].mxu0
        %918 = vmatprep.mubr.f32.mxu0 0.0
        %919 = vmatmul.mubr.f32.gmra.mrb[0].mxu0 %v774
        %v920 = vpop.f32.mrb[0].mxu0
        %v921 = vadd.f32 0.0, %v920
        %v922 = vpop.f32.mrb[0].mxu0
        %923 = vmatprep.mubr.f32.mxu0 0.0
        %924 = vmatmul.mubr.f32.gmra.mrb[0].mxu0 %v775
        %v925 = vpop.f32.mrb[0].mxu0
        %v926 = vadd.f32 0.0, %v925
        %v927 = vpop.f32.mrb[0].mxu0
        %928 = vmatprep.mubr.f32.mxu0 0.0
        %929 = vmatmul.mubr.f32.gmra.mrb[0].mxu0 %v776
        %v930 = vpop.f32.mrb[0].mxu0
        %v931 = vadd.f32 0.0, %v930
        %v932 = vpop.f32.mrb[0].mxu0
        %933 = vmatprep.mubr.f32.mxu0 0.0
        %934 = vmatmul.mubr.f32.gmra.mrb[0].mxu0 %v777
        %v935 = vpop.f32.mrb[0].mxu0
        %v936 = vadd.f32 0.0, %v935
        %v937 = vpop.f32.mrb[0].mxu0
        %938 = vmatprep.mubr.f32.mxu0 0.0
        %939 = vmatmul.mubr.f32.gmra.mrb[0].mxu0 %v778
        %v940 = vpop.f32.mrb[0].mxu0
        %v941 = vadd.f32 0.0, %v940
        %v942 = vpop.f32.mrb[0].mxu0
        %943 = vmatprep.mubr.f32.mxu0 0.0
        %944 = vmatmul.mubr.f32.gmra.mrb[0].mxu0 %v779
        %v945 = vpop.f32.mrb[0].mxu0
        %v946 = vadd.f32 0.0, %v945
        %v947 = vpop.f32.mrb[0].mxu0
        %948 = vmatprep.mubr.f32.mxu0 0.0
        %949 = vmatmul.mubr.f32.gmra.mrb[0].mxu0 %v780
        %v950 = vpop.f32.mrb[0].mxu0
        %v951 = vadd.f32 0.0, %v950
        %v952 = vpop.f32.mrb[0].mxu0
        %953 = vmatprep.mubr.f32.mxu0 0.0
        %954 = vmatmul.mubr.f32.gmra.mrb[0].mxu0 %v781
        %v955 = vpop.f32.mrb[0].mxu0
        %v956 = vadd.f32 0.0, %v955
        %v957 = vpop.f32.mrb[0].mxu0
        %958 = vdwg.mxu0
        %959 = vmatprep.subr.mxu0 0.0
        %960 = vmatpush1.msra.mxu0 %v782
        %961 = vmatprep.subr.mxu0 0.0
        %962 = vmatpush1.msra.mxu0 %v783
        %963 = vmatprep.subr.mxu0 0.0
        %964 = vmatpush1.msra.mxu0 %v784
        %965 = vmatprep.subr.mxu0 0.0
        %966 = vmatpush1.msra.mxu0 %v785
        %967 = vmatprep.subr.mxu0 0.0
        %968 = vmatpush1.msra.mxu0 %v786
        %969 = vmatprep.subr.mxu0 0.0
        %970 = vmatpush1.msra.mxu0 %v787
        %971 = vmatprep.subr.mxu0 0.0
        %972 = vmatpush1.msra.mxu0 %v788
        %973 = vmatprep.subr.mxu0 0.0
        %974 = vmatpush1.msra.mxu0 %v789
        %975 = vmatprep.subr.mxu0 0.0
        %976 = vmatpush1.msra.mxu0 %v790
        %977 = vmatprep.subr.mxu0 0.0
        %978 = vmatpush1.msra.mxu0 %v791
        %979 = vmatprep.subr.mxu0 0.0
        %980 = vmatpush1.msra.mxu0 %v792
        %981 = vmatprep.subr.mxu0 0.0
        %982 = vmatpush1.msra.mxu0 %v793
        %983 = vmatprep.subr.mxu0 0.0
        %984 = vmatpush1.msra.mxu0 %v794
        %985 = vmatprep.subr.mxu0 0.0
        %986 = vmatpush1.msra.mxu0 %v795
        %987 = vmatprep.subr.mxu0 0.0
        %988 = vmatpush1.msra.mxu0 %v796
        %989 = vmatprep.subr.mxu0 0.0
        %990 = vmatpush1.msra.mxu0 %v797
        %991 = vmatprep.subr.mxu0 0.0
        %992 = vmatpush1.msra.mxu0 0.0
        %993 = vmatprep.subr.mxu0 0.0
        %994 = vmatpush1.msra.mxu0 0.0
        %995 = vmatprep.subr.mxu0 0.0
        %996 = vmatpush1.msra.mxu0 0.0
        %997 = vmatprep.subr.mxu0 0.0
        %998 = vmatpush1.msra.mxu0 0.0
        %999 = vmatprep.subr.mxu0 0.0
        %1000 = vmatpush1.msra.mxu0 0.0
        %1001 = vmatprep.subr.mxu0 0.0
        %1002 = vmatpush1.msra.mxu0 0.0
        %1003 = vmatprep.subr.mxu0 0.0
        %1004 = vmatpush1.msra.mxu0 0.0
        %1005 = vmatprep.subr.mxu0 0.0
        %1006 = vmatpush1.msra.mxu0 0.0
        %1007 = vmatprep.subr.mxu0 0.0
        %1008 = vmatpush1.msra.mxu0 0.0
        %1009 = vmatprep.subr.mxu0 0.0
        %1010 = vmatpush1.msra.mxu0 0.0
        %1011 = vmatprep.subr.mxu0 0.0
        %1012 = vmatpush1.msra.mxu0 0.0
        %1013 = vmatprep.subr.mxu0 0.0
        %1014 = vmatpush1.msra.mxu0 0.0
        %1015 = vmatprep.subr.mxu0 0.0
        %1016 = vmatpush1.msra.mxu0 0.0
        %1017 = vmatprep.subr.mxu0 0.0
        %1018 = vmatpush1.msra.mxu0 0.0
        %1019 = vmatprep.subr.mxu0 0.0
        %1020 = vmatpush1.msra.mxu0 0.0
        %1021 = vmatprep.subr.mxu0 0.0
        %1022 = vmatpush1.msra.mxu0 0.0
        %1023 = vmatprep.mubr.f32.mxu0 0.0
        %1024 = vmatmul.mubr.f32.gmra.mrb[0].mxu0 %v517
        %v1025 = vpop.f32.mrb[0].mxu0
        %v1026 = vadd.f32 %v881, %v1025
        %v1027 = vpop.f32.mrb[0].mxu0
        %1028 = vmatprep.mubr.f32.mxu0 0.0
        %1029 = vmatmul.mubr.f32.gmra.mrb[0].mxu0 %v518
        %v1030 = vpop.f32.mrb[0].mxu0
        %v1031 = vadd.f32 %v886, %v1030
        %v1032 = vpop.f32.mrb[0].mxu0
        %1033 = vmatprep.mubr.f32.mxu0 0.0
        %1034 = vmatmul.mubr.f32.gmra.mrb[0].mxu0 %v519
        %v1035 = vpop.f32.mrb[0].mxu0
        %v1036 = vadd.f32 %v891, %v1035
        %v1037 = vpop.f32.mrb[0].mxu0
        %1038 = vmatprep.mubr.f32.mxu0 0.0
        %1039 = vmatmul.mubr.f32.gmra.mrb[0].mxu0 %v520
        %v1040 = vpop.f32.mrb[0].mxu0
        %v1041 = vadd.f32 %v896, %v1040
        %v1042 = vpop.f32.mrb[0].mxu0
        %1043 = vmatprep.mubr.f32.mxu0 0.0
        %1044 = vmatmul.mubr.f32.gmra.mrb[0].mxu0 %v521
        %v1045 = vpop.f32.mrb[0].mxu0
        %v1046 = vadd.f32 %v901, %v1045
        %v1047 = vpop.f32.mrb[0].mxu0
        %1048 = vmatprep.mubr.f32.mxu0 0.0
        %1049 = vmatmul.mubr.f32.gmra.mrb[0].mxu0 %v522
        %v1050 = vpop.f32.mrb[0].mxu0
        %v1051 = vadd.f32 %v906, %v1050
        %v1052 = vpop.f32.mrb[0].mxu0
        %1053 = vmatprep.mubr.f32.mxu0 0.0
        %1054 = vmatmul.mubr.f32.gmra.mrb[0].mxu0 %v523
        %v1055 = vpop.f32.mrb[0].mxu0
        %v1056 = vadd.f32 %v911, %v1055
        %v1057 = vpop.f32.mrb[0].mxu0
        %1058 = vmatprep.mubr.f32.mxu0 0.0
        %1059 = vmatmul.mubr.f32.gmra.mrb[0].mxu0 %v524
        %v1060 = vpop.f32.mrb[0].mxu0
        %v1061 = vadd.f32 %v916, %v1060
        %v1062 = vpop.f32.mrb[0].mxu0
        %1063 = vmatprep.mubr.f32.mxu0 0.0
        %1064 = vmatmul.mubr.f32.gmra.mrb[0].mxu0 %v525
        %v1065 = vpop.f32.mrb[0].mxu0
        %v1066 = vadd.f32 %v921, %v1065
        %v1067 = vpop.f32.mrb[0].mxu0
        %1068 = vmatprep.mubr.f32.mxu0 0.0
        %1069 = vmatmul.mubr.f32.gmra.mrb[0].mxu0 %v526
        %v1070 = vpop.f32.mrb[0].mxu0
        %v1071 = vadd.f32 %v926, %v1070
        %v1072 = vpop.f32.mrb[0].mxu0
        %1073 = vmatprep.mubr.f32.mxu0 0.0
        %1074 = vmatmul.mubr.f32.gmra.mrb[0].mxu0 %v527
        %v1075 = vpop.f32.mrb[0].mxu0
        %v1076 = vadd.f32 %v931, %v1075
        %v1077 = vpop.f32.mrb[0].mxu0
        %1078 = vmatprep.mubr.f32.mxu0 0.0
        %1079 = vmatmul.mubr.f32.gmra.mrb[0].mxu0 %v528
        %v1080 = vpop.f32.mrb[0].mxu0
        %v1081 = vadd.f32 %v936, %v1080
        %v1082 = vpop.f32.mrb[0].mxu0
        %1083 = vmatprep.mubr.f32.mxu0 0.0
        %1084 = vmatmul.mubr.f32.gmra.mrb[0].mxu0 %v529
        %v1085 = vpop.f32.mrb[0].mxu0
        %v1086 = vadd.f32 %v941, %v1085
        %v1087 = vpop.f32.mrb[0].mxu0
        %1088 = vmatprep.mubr.f32.mxu0 0.0
        %1089 = vmatmul.mubr.f32.gmra.mrb[0].mxu0 %v530
        %v1090 = vpop.f32.mrb[0].mxu0
        %v1091 = vadd.f32 %v946, %v1090
        %v1092 = vpop.f32.mrb[0].mxu0
        %1093 = vmatprep.mubr.f32.mxu0 0.0
        %1094 = vmatmul.mubr.f32.gmra.mrb[0].mxu0 %v531
        %v1095 = vpop.f32.mrb[0].mxu0
        %v1096 = vadd.f32 %v951, %v1095
        %v1097 = vpop.f32.mrb[0].mxu0
        %1098 = vmatprep.mubr.f32.mxu0 0.0
        %1099 = vmatmul.mubr.f32.gmra.mrb[0].mxu0 %v532
        %v1100 = vpop.f32.mrb[0].mxu0
        %v1101 = vadd.f32 %v956, %v1100
        %v1102 = vpop.f32.mrb[0].mxu0
        %1103 = vdwg.mxu0
        %v1104 = vld [vmem:[%s5] sm:$0x1]
        %v1106 = vlaneseq
        %v1107 = vshrl.u32 %v1106, 7
        %v1108 = vsub.s32 0, %v1107
        %v1109 = vrot.slane %v1104, %v1108
        %v1111 = vadd.f32 %v1026, %v1109
        %v1112 = vadd.f32 %v1031, %v1109
        %v1113 = vadd.f32 %v1036, %v1109
        %v1114 = vadd.f32 %v1041, %v1109
        %v1115 = vadd.f32 %v1046, %v1109
        %v1116 = vadd.f32 %v1051, %v1109
        %v1117 = vadd.f32 %v1056, %v1109
        %v1118 = vadd.f32 %v1061, %v1109
        %v1119 = vadd.f32 %v1066, %v1109
        %v1120 = vadd.f32 %v1071, %v1109
        %v1121 = vadd.f32 %v1076, %v1109
        %v1122 = vadd.f32 %v1081, %v1109
        %v1123 = vadd.f32 %v1086, %v1109
        %v1124 = vadd.f32 %v1091, %v1109
        %v1125 = vadd.f32 %v1096, %v1109
        %v1126 = vadd.f32 %v1101, %v1109
        %v1127 = vmax.f32 %v1111, 0.0
        %v1128 = vmax.f32 %v1112, 0.0
        %v1129 = vmax.f32 %v1113, 0.0
        %v1130 = vmax.f32 %v1114, 0.0
        %v1131 = vmax.f32 %v1115, 0.0
        %v1132 = vmax.f32 %v1116, 0.0
        %v1133 = vmax.f32 %v1117, 0.0
        %v1134 = vmax.f32 %v1118, 0.0
        %v1135 = vmax.f32 %v1119, 0.0
        %v1136 = vmax.f32 %v1120, 0.0
        %v1137 = vmax.f32 %v1121, 0.0
        %v1138 = vmax.f32 %v1122, 0.0
        %v1139 = vmax.f32 %v1123, 0.0
        %v1140 = vmax.f32 %v1124, 0.0
        %v1141 = vmax.f32 %v1125, 0.0
        %v1142 = vmax.f32 %v1126, 0.0
        %v1143 = vld [vmem:[#allocation12] sm:$0xff]
        %v1144 = vld [vmem:[#allocation12 + $0x8] sm:$0xff]
        %v1145 = vld [vmem:[#allocation12 + $0x10] sm:$0xff]
        %v1146 = vld [vmem:[#allocation12 + $0x18] sm:$0xff]
        %v1147 = vld [vmem:[#allocation12 + $0x20] sm:$0xff]
        %v1148 = vld [vmem:[#allocation12 + $0x28] sm:$0xff]
        %v1149 = vld [vmem:[#allocation12 + $0x30] sm:$0xff]
        %v1150 = vld [vmem:[#allocation12 + $0x38] sm:$0xff]
        %v1151 = vld [vmem:[#allocation12 + $0x40] sm:$0xff]
        %v1152 = vld [vmem:[#allocation12 + $0x48] sm:$0xff]
        %v1153 = vld [vmem:[#allocation12 + $0x50] sm:$0xff]
        %v1154 = vld [vmem:[#allocation12 + $0x58] sm:$0xff]
        %v1155 = vld [vmem:[#allocation12 + $0x60] sm:$0xff]
        %v1156 = vld [vmem:[#allocation12 + $0x68] sm:$0xff]
        %v1157 = vld [vmem:[#allocation12 + $0x70] sm:$0xff]
        %v1158 = vld [vmem:[#allocation12 + $0x78] sm:$0xff]
        %v1159 = vld [vmem:[#allocation13] sm:$0xff]
        %v1160 = vld [vmem:[#allocation13 + $0x8] sm:$0xff]
        %v1161 = vld [vmem:[#allocation13 + $0x10] sm:$0xff]
        %v1162 = vld [vmem:[#allocation13 + $0x18] sm:$0xff]
        %v1163 = vld [vmem:[#allocation13 + $0x20] sm:$0xff]
        %v1164 = vld [vmem:[#allocation13 + $0x28] sm:$0xff]
        %v1165 = vld [vmem:[#allocation13 + $0x30] sm:$0xff]
        %v1166 = vld [vmem:[#allocation13 + $0x38] sm:$0xff]
        %v1167 = vld [vmem:[#allocation13 + $0x40] sm:$0xff]
        %v1168 = vld [vmem:[#allocation13 + $0x48] sm:$0xff]
        %v1169 = vld [vmem:[#allocation13 + $0x50] sm:$0xff]
        %v1170 = vld [vmem:[#allocation13 + $0x58] sm:$0xff]
        %v1171 = vld [vmem:[#allocation13 + $0x60] sm:$0xff]
        %v1172 = vld [vmem:[#allocation13 + $0x68] sm:$0xff]
        %v1173 = vld [vmem:[#allocation13 + $0x70] sm:$0xff]
        %v1174 = vld [vmem:[#allocation13 + $0x78] sm:$0xff]
        %1175 = vmatprep.subr.mxu0 0.0
        %1176 = vmatpush1.msra.mxu0 %v1159
        %1177 = vmatprep.subr.mxu0 0.0
        %1178 = vmatpush1.msra.mxu0 %v1160
        %1179 = vmatprep.subr.mxu0 0.0
        %1180 = vmatpush1.msra.mxu0 %v1161
        %1181 = vmatprep.subr.mxu0 0.0
        %1182 = vmatpush1.msra.mxu0 %v1162
        %1183 = vmatprep.subr.mxu0 0.0
        %1184 = vmatpush1.msra.mxu0 %v1163
        %1185 = vmatprep.subr.mxu0 0.0
        %1186 = vmatpush1.msra.mxu0 %v1164
        %1187 = vmatprep.subr.mxu0 0.0
        %1188 = vmatpush1.msra.mxu0 %v1165
        %1189 = vmatprep.subr.mxu0 0.0
        %1190 = vmatpush1.msra.mxu0 %v1166
        %1191 = vmatprep.subr.mxu0 0.0
        %1192 = vmatpush1.msra.mxu0 %v1167
        %1193 = vmatprep.subr.mxu0 0.0
        %1194 = vmatpush1.msra.mxu0 %v1168
        %1195 = vmatprep.subr.mxu0 0.0
        %1196 = vmatpush1.msra.mxu0 %v1169
        %1197 = vmatprep.subr.mxu0 0.0
        %1198 = vmatpush1.msra.mxu0 %v1170
        %1199 = vmatprep.subr.mxu0 0.0
        %1200 = vmatpush1.msra.mxu0 %v1171
        %1201 = vmatprep.subr.mxu0 0.0
        %1202 = vmatpush1.msra.mxu0 %v1172
        %1203 = vmatprep.subr.mxu0 0.0
        %1204 = vmatpush1.msra.mxu0 %v1173
        %1205 = vmatprep.subr.mxu0 0.0
        %1206 = vmatpush1.msra.mxu0 %v1174
        %1207 = vmatprep.subr.mxu0 0.0
        %1208 = vmatpush1.msra.mxu0 0.0
        %1209 = vmatprep.subr.mxu0 0.0
        %1210 = vmatpush1.msra.mxu0 0.0
        %1211 = vmatprep.subr.mxu0 0.0
        %1212 = vmatpush1.msra.mxu0 0.0
        %1213 = vmatprep.subr.mxu0 0.0
        %1214 = vmatpush1.msra.mxu0 0.0
        %1215 = vmatprep.subr.mxu0 0.0
        %1216 = vmatpush1.msra.mxu0 0.0
        %1217 = vmatprep.subr.mxu0 0.0
        %1218 = vmatpush1.msra.mxu0 0.0
        %1219 = vmatprep.subr.mxu0 0.0
        %1220 = vmatpush1.msra.mxu0 0.0
        %1221 = vmatprep.subr.mxu0 0.0
        %1222 = vmatpush1.msra.mxu0 0.0
        %1223 = vmatprep.subr.mxu0 0.0
        %1224 = vmatpush1.msra.mxu0 0.0
        %1225 = vmatprep.subr.mxu0 0.0
        %1226 = vmatpush1.msra.mxu0 0.0
        %1227 = vmatprep.subr.mxu0 0.0
        %1228 = vmatpush1.msra.mxu0 0.0
        %1229 = vmatprep.subr.mxu0 0.0
        %1230 = vmatpush1.msra.mxu0 0.0
        %1231 = vmatprep.subr.mxu0 0.0
        %1232 = vmatpush1.msra.mxu0 0.0
        %1233 = vmatprep.subr.mxu0 0.0
        %1234 = vmatpush1.msra.mxu0 0.0
        %1235 = vmatprep.subr.mxu0 0.0
        %1236 = vmatpush1.msra.mxu0 0.0
        %1237 = vmatprep.subr.mxu0 0.0
        %1238 = vmatpush1.msra.mxu0 0.0
        %1239 = vmatprep.mubr.f32.mxu0 0.0
        %1240 = vmatmul.mubr.f32.gmra.mrb[0].mxu0 %v766
        %v1241 = vpop.f32.mrb[0].mxu0
        %v1242 = vadd.f32 0.0, %v1241
        %v1243 = vpop.f32.mrb[0].mxu0
        %1244 = vmatprep.mubr.f32.mxu0 0.0
        %1245 = vmatmul.mubr.f32.gmra.mrb[0].mxu0 %v767
        %v1246 = vpop.f32.mrb[0].mxu0
        %v1247 = vadd.f32 0.0, %v1246
        %v1248 = vpop.f32.mrb[0].mxu0
        %1249 = vmatprep.mubr.f32.mxu0 0.0
        %1250 = vmatmul.mubr.f32.gmra.mrb[0].mxu0 %v768
        %v1251 = vpop.f32.mrb[0].mxu0
        %v1252 = vadd.f32 0.0, %v1251
        %v1253 = vpop.f32.mrb[0].mxu0
        %1254 = vmatprep.mubr.f32.mxu0 0.0
        %1255 = vmatmul.mubr.f32.gmra.mrb[0].mxu0 %v769
        %v1256 = vpop.f32.mrb[0].mxu0
        %v1257 = vadd.f32 0.0, %v1256
        %v1258 = vpop.f32.mrb[0].mxu0
        %1259 = vmatprep.mubr.f32.mxu0 0.0
        %1260 = vmatmul.mubr.f32.gmra.mrb[0].mxu0 %v770
        %v1261 = vpop.f32.mrb[0].mxu0
        %v1262 = vadd.f32 0.0, %v1261
        %v1263 = vpop.f32.mrb[0].mxu0
        %1264 = vmatprep.mubr.f32.mxu0 0.0
        %1265 = vmatmul.mubr.f32.gmra.mrb[0].mxu0 %v771
        %v1266 = vpop.f32.mrb[0].mxu0
        %v1267 = vadd.f32 0.0, %v1266
        %v1268 = vpop.f32.mrb[0].mxu0
        %1269 = vmatprep.mubr.f32.mxu0 0.0
        %1270 = vmatmul.mubr.f32.gmra.mrb[0].mxu0 %v772
        %v1271 = vpop.f32.mrb[0].mxu0
        %v1272 = vadd.f32 0.0, %v1271
        %v1273 = vpop.f32.mrb[0].mxu0
        %1274 = vmatprep.mubr.f32.mxu0 0.0
        %1275 = vmatmul.mubr.f32.gmra.mrb[0].mxu0 %v773
        %v1276 = vpop.f32.mrb[0].mxu0
        %v1277 = vadd.f32 0.0, %v1276
        %v1278 = vpop.f32.mrb[0].mxu0
        %1279 = vmatprep.mubr.f32.mxu0 0.0
        %1280 = vmatmul.mubr.f32.gmra.mrb[0].mxu0 %v774
        %v1281 = vpop.f32.mrb[0].mxu0
        %v1282 = vadd.f32 0.0, %v1281
        %v1283 = vpop.f32.mrb[0].mxu0
        %1284 = vmatprep.mubr.f32.mxu0 0.0
        %1285 = vmatmul.mubr.f32.gmra.mrb[0].mxu0 %v775
        %v1286 = vpop.f32.mrb[0].mxu0
        %v1287 = vadd.f32 0.0, %v1286
        %v1288 = vpop.f32.mrb[0].mxu0
        %1289 = vmatprep.mubr.f32.mxu0 0.0
        %1290 = vmatmul.mubr.f32.gmra.mrb[0].mxu0 %v776
        %v1291 = vpop.f32.mrb[0].mxu0
        %v1292 = vadd.f32 0.0, %v1291
        %v1293 = vpop.f32.mrb[0].mxu0
        %1294 = vmatprep.mubr.f32.mxu0 0.0
        %1295 = vmatmul.mubr.f32.gmra.mrb[0].mxu0 %v777
        %v1296 = vpop.f32.mrb[0].mxu0
        %v1297 = vadd.f32 0.0, %v1296
        %v1298 = vpop.f32.mrb[0].mxu0
        %1299 = vmatprep.mubr.f32.mxu0 0.0
        %1300 = vmatmul.mubr.f32.gmra.mrb[0].mxu0 %v778
        %v1301 = vpop.f32.mrb[0].mxu0
        %v1302 = vadd.f32 0.0, %v1301
        %v1303 = vpop.f32.mrb[0].mxu0
        %1304 = vmatprep.mubr.f32.mxu0 0.0
        %1305 = vmatmul.mubr.f32.gmra.mrb[0].mxu0 %v779
        %v1306 = vpop.f32.mrb[0].mxu0
        %v1307 = vadd.f32 0.0, %v1306
        %v1308 = vpop.f32.mrb[0].mxu0
        %1309 = vmatprep.mubr.f32.mxu0 0.0
        %1310 = vmatmul.mubr.f32.gmra.mrb[0].mxu0 %v780
        %v1311 = vpop.f32.mrb[0].mxu0
        %v1312 = vadd.f32 0.0, %v1311
        %v1313 = vpop.f32.mrb[0].mxu0
        %1314 = vmatprep.mubr.f32.mxu0 0.0
        %1315 = vmatmul.mubr.f32.gmra.mrb[0].mxu0 %v781
        %v1316 = vpop.f32.mrb[0].mxu0
        %v1317 = vadd.f32 0.0, %v1316
        %v1318 = vpop.f32.mrb[0].mxu0
        %1319 = vdwg.mxu0
        %1320 = vmatprep.subr.mxu0 0.0
        %1321 = vmatpush1.msra.mxu0 %v1143
        %1322 = vmatprep.subr.mxu0 0.0
        %1323 = vmatpush1.msra.mxu0 %v1144
        %1324 = vmatprep.subr.mxu0 0.0
        %1325 = vmatpush1.msra.mxu0 %v1145
        %1326 = vmatprep.subr.mxu0 0.0
        %1327 = vmatpush1.msra.mxu0 %v1146
        %1328 = vmatprep.subr.mxu0 0.0
        %1329 = vmatpush1.msra.mxu0 %v1147
        %1330 = vmatprep.subr.mxu0 0.0
        %1331 = vmatpush1.msra.mxu0 %v1148
        %1332 = vmatprep.subr.mxu0 0.0
        %1333 = vmatpush1.msra.mxu0 %v1149
        %1334 = vmatprep.subr.mxu0 0.0
        %1335 = vmatpush1.msra.mxu0 %v1150
        %1336 = vmatprep.subr.mxu0 0.0
        %1337 = vmatpush1.msra.mxu0 %v1151
        %1338 = vmatprep.subr.mxu0 0.0
        %1339 = vmatpush1.msra.mxu0 %v1152
        %1340 = vmatprep.subr.mxu0 0.0
        %1341 = vmatpush1.msra.mxu0 %v1153
        %1342 = vmatprep.subr.mxu0 0.0
        %1343 = vmatpush1.msra.mxu0 %v1154
        %1344 = vmatprep.subr.mxu0 0.0
        %1345 = vmatpush1.msra.mxu0 %v1155
        %1346 = vmatprep.subr.mxu0 0.0
        %1347 = vmatpush1.msra.mxu0 %v1156
        %1348 = vmatprep.subr.mxu0 0.0
        %1349 = vmatpush1.msra.mxu0 %v1157
        %1350 = vmatprep.subr.mxu0 0.0
        %1351 = vmatpush1.msra.mxu0 %v1158
        %1352 = vmatprep.subr.mxu0 0.0
        %1353 = vmatpush1.msra.mxu0 0.0
        %1354 = vmatprep.subr.mxu0 0.0
        %1355 = vmatpush1.msra.mxu0 0.0
        %1356 = vmatprep.subr.mxu0 0.0
        %1357 = vmatpush1.msra.mxu0 0.0
        %1358 = vmatprep.subr.mxu0 0.0
        %1359 = vmatpush1.msra.mxu0 0.0
        %1360 = vmatprep.subr.mxu0 0.0
        %1361 = vmatpush1.msra.mxu0 0.0
        %1362 = vmatprep.subr.mxu0 0.0
        %1363 = vmatpush1.msra.mxu0 0.0
        %1364 = vmatprep.subr.mxu0 0.0
        %1365 = vmatpush1.msra.mxu0 0.0
        %1366 = vmatprep.subr.mxu0 0.0
        %1367 = vmatpush1.msra.mxu0 0.0
        %1368 = vmatprep.subr.mxu0 0.0
        %1369 = vmatpush1.msra.mxu0 0.0
        %1370 = vmatprep.subr.mxu0 0.0
        %1371 = vmatpush1.msra.mxu0 0.0
        %1372 = vmatprep.subr.mxu0 0.0
        %1373 = vmatpush1.msra.mxu0 0.0
        %1374 = vmatprep.subr.mxu0 0.0
        %1375 = vmatpush1.msra.mxu0 0.0
        %1376 = vmatprep.subr.mxu0 0.0
        %1377 = vmatpush1.msra.mxu0 0.0
        %1378 = vmatprep.subr.mxu0 0.0
        %1379 = vmatpush1.msra.mxu0 0.0
        %1380 = vmatprep.subr.mxu0 0.0
        %1381 = vmatpush1.msra.mxu0 0.0
        %1382 = vmatprep.subr.mxu0 0.0
        %1383 = vmatpush1.msra.mxu0 0.0
        %1384 = vmatprep.mubr.f32.mxu0 0.0
        %1385 = vmatmul.mubr.f32.gmra.mrb[0].mxu0 %v517
        %v1386 = vpop.f32.mrb[0].mxu0
        %v1387 = vadd.f32 %v1242, %v1386
        %v1388 = vpop.f32.mrb[0].mxu0
        %1389 = vmatprep.mubr.f32.mxu0 0.0
        %1390 = vmatmul.mubr.f32.gmra.mrb[0].mxu0 %v518
        %v1391 = vpop.f32.mrb[0].mxu0
        %v1392 = vadd.f32 %v1247, %v1391
        %v1393 = vpop.f32.mrb[0].mxu0
        %1394 = vmatprep.mubr.f32.mxu0 0.0
        %1395 = vmatmul.mubr.f32.gmra.mrb[0].mxu0 %v519
        %v1396 = vpop.f32.mrb[0].mxu0
        %v1397 = vadd.f32 %v1252, %v1396
        %v1398 = vpop.f32.mrb[0].mxu0
        %1399 = vmatprep.mubr.f32.mxu0 0.0
        %1400 = vmatmul.mubr.f32.gmra.mrb[0].mxu0 %v520
        %v1401 = vpop.f32.mrb[0].mxu0
        %v1402 = vadd.f32 %v1257, %v1401
        %v1403 = vpop.f32.mrb[0].mxu0
        %1404 = vmatprep.mubr.f32.mxu0 0.0
        %1405 = vmatmul.mubr.f32.gmra.mrb[0].mxu0 %v521
        %v1406 = vpop.f32.mrb[0].mxu0
        %v1407 = vadd.f32 %v1262, %v1406
        %v1408 = vpop.f32.mrb[0].mxu0
        %1409 = vmatprep.mubr.f32.mxu0 0.0
        %1410 = vmatmul.mubr.f32.gmra.mrb[0].mxu0 %v522
        %v1411 = vpop.f32.mrb[0].mxu0
        %v1412 = vadd.f32 %v1267, %v1411
        %v1413 = vpop.f32.mrb[0].mxu0
        %1414 = vmatprep.mubr.f32.mxu0 0.0
        %1415 = vmatmul.mubr.f32.gmra.mrb[0].mxu0 %v523
        %v1416 = vpop.f32.mrb[0].mxu0
        %v1417 = vadd.f32 %v1272, %v1416
        %v1418 = vpop.f32.mrb[0].mxu0
        %1419 = vmatprep.mubr.f32.mxu0 0.0
        %1420 = vmatmul.mubr.f32.gmra.mrb[0].mxu0 %v524
        %v1421 = vpop.f32.mrb[0].mxu0
        %v1422 = vadd.f32 %v1277, %v1421
        %v1423 = vpop.f32.mrb[0].mxu0
        %1424 = vmatprep.mubr.f32.mxu0 0.0
        %1425 = vmatmul.mubr.f32.gmra.mrb[0].mxu0 %v525
        %v1426 = vpop.f32.mrb[0].mxu0
        %v1427 = vadd.f32 %v1282, %v1426
        %v1428 = vpop.f32.mrb[0].mxu0
        %1429 = vmatprep.mubr.f32.mxu0 0.0
        %1430 = vmatmul.mubr.f32.gmra.mrb[0].mxu0 %v526
        %v1431 = vpop.f32.mrb[0].mxu0
        %v1432 = vadd.f32 %v1287, %v1431
        %v1433 = vpop.f32.mrb[0].mxu0
        %1434 = vmatprep.mubr.f32.mxu0 0.0
        %1435 = vmatmul.mubr.f32.gmra.mrb[0].mxu0 %v527
        %v1436 = vpop.f32.mrb[0].mxu0
        %v1437 = vadd.f32 %v1292, %v1436
        %v1438 = vpop.f32.mrb[0].mxu0
        %1439 = vmatprep.mubr.f32.mxu0 0.0
        %1440 = vmatmul.mubr.f32.gmra.mrb[0].mxu0 %v528
        %v1441 = vpop.f32.mrb[0].mxu0
        %v1442 = vadd.f32 %v1297, %v1441
        %v1443 = vpop.f32.mrb[0].mxu0
        %1444 = vmatprep.mubr.f32.mxu0 0.0
        %1445 = vmatmul.mubr.f32.gmra.mrb[0].mxu0 %v529
        %v1446 = vpop.f32.mrb[0].mxu0
        %v1447 = vadd.f32 %v1302, %v1446
        %v1448 = vpop.f32.mrb[0].mxu0
        %1449 = vmatprep.mubr.f32.mxu0 0.0
        %1450 = vmatmul.mubr.f32.gmra.mrb[0].mxu0 %v530
        %v1451 = vpop.f32.mrb[0].mxu0
        %v1452 = vadd.f32 %v1307, %v1451
        %v1453 = vpop.f32.mrb[0].mxu0
        %1454 = vmatprep.mubr.f32.mxu0 0.0
        %1455 = vmatmul.mubr.f32.gmra.mrb[0].mxu0 %v531
        %v1456 = vpop.f32.mrb[0].mxu0
        %v1457 = vadd.f32 %v1312, %v1456
        %v1458 = vpop.f32.mrb[0].mxu0
        %1459 = vmatprep.mubr.f32.mxu0 0.0
        %1460 = vmatmul.mubr.f32.gmra.mrb[0].mxu0 %v532
        %v1461 = vpop.f32.mrb[0].mxu0
        %v1462 = vadd.f32 %v1317, %v1461
        %v1463 = vpop.f32.mrb[0].mxu0
        %1464 = vdwg.mxu0
        %v1465 = vld [vmem:[%s8] sm:$0x1]
        %v1467 = vlaneseq
        %v1468 = vshrl.u32 %v1467, 7
        %v1469 = vsub.s32 0, %v1468
        %v1470 = vrot.slane %v1465, %v1469
        %v1472 = vadd.f32 %v1387, %v1470
        %v1473 = vadd.f32 %v1392, %v1470
        %v1474 = vadd.f32 %v1397, %v1470
        %v1475 = vadd.f32 %v1402, %v1470
        %v1476 = vadd.f32 %v1407, %v1470
        %v1477 = vadd.f32 %v1412, %v1470
        %v1478 = vadd.f32 %v1417, %v1470
        %v1479 = vadd.f32 %v1422, %v1470
        %v1480 = vadd.f32 %v1427, %v1470
        %v1481 = vadd.f32 %v1432, %v1470
        %v1482 = vadd.f32 %v1437, %v1470
        %v1483 = vadd.f32 %v1442, %v1470
        %v1484 = vadd.f32 %v1447, %v1470
        %v1485 = vadd.f32 %v1452, %v1470
        %v1486 = vadd.f32 %v1457, %v1470
        %v1487 = vadd.f32 %v1462, %v1470
        %v1488 = vmax.f32 %v1472, 0.0
        %v1489 = vmax.f32 %v1473, 0.0
        %v1490 = vmax.f32 %v1474, 0.0
        %v1491 = vmax.f32 %v1475, 0.0
        %v1492 = vmax.f32 %v1476, 0.0
        %v1493 = vmax.f32 %v1477, 0.0
        %v1494 = vmax.f32 %v1478, 0.0
        %v1495 = vmax.f32 %v1479, 0.0
        %v1496 = vmax.f32 %v1480, 0.0
        %v1497 = vmax.f32 %v1481, 0.0
        %v1498 = vmax.f32 %v1482, 0.0
        %v1499 = vmax.f32 %v1483, 0.0
        %v1500 = vmax.f32 %v1484, 0.0
        %v1501 = vmax.f32 %v1485, 0.0
        %v1502 = vmax.f32 %v1486, 0.0
        %v1503 = vmax.f32 %v1487, 0.0
        %v1504 = vlaneseq
        %v1505 = vand.u32 %v1504, 127
        %vm1506 = vcmp.lt.s32.totalorder %v1505, 4
        %v1507 = vsel %vm1506, %v1488, 0.0
        %v1508 = vsel %vm1506, %v1489, 0.0
        %v1509 = vsel %vm1506, %v1490, 0.0
        %v1510 = vsel %vm1506, %v1491, 0.0
        %v1511 = vsel %vm1506, %v1492, 0.0
        %v1512 = vsel %vm1506, %v1493, 0.0
        %v1513 = vsel %vm1506, %v1494, 0.0
        %v1514 = vsel %vm1506, %v1495, 0.0
        %v1515 = vsel %vm1506, %v1496, 0.0
        %v1516 = vsel %vm1506, %v1497, 0.0
        %v1517 = vsel %vm1506, %v1498, 0.0
        %v1518 = vsel %vm1506, %v1499, 0.0
        %v1519 = vsel %vm1506, %v1500, 0.0
        %v1520 = vsel %vm1506, %v1501, 0.0
        %v1521 = vsel %vm1506, %v1502, 0.0
        %v1522 = vsel %vm1506, %v1503, 0.0
        %1523 = vmax.xlane.f32.xlu0 %v1507
        %v1524 = vpop.xlane.xlu0 %1523
        %1525 = vmax.xlane.f32.xlu0 %v1508
        %v1526 = vpop.xlane.xlu0 %1525
        %1527 = vmax.xlane.f32.xlu0 %v1509
        %v1528 = vpop.xlane.xlu0 %1527
        %1529 = vmax.xlane.f32.xlu0 %v1510
        %v1530 = vpop.xlane.xlu0 %1529
        %1531 = vmax.xlane.f32.xlu0 %v1511
        %v1532 = vpop.xlane.xlu0 %1531
        %1533 = vmax.xlane.f32.xlu0 %v1512
        %v1534 = vpop.xlane.xlu0 %1533
        %1535 = vmax.xlane.f32.xlu0 %v1513
        %v1536 = vpop.xlane.xlu0 %1535
        %1537 = vmax.xlane.f32.xlu0 %v1514
        %v1538 = vpop.xlane.xlu0 %1537
        %1539 = vmax.xlane.f32.xlu0 %v1515
        %v1540 = vpop.xlane.xlu0 %1539
        %1541 = vmax.xlane.f32.xlu0 %v1516
        %v1542 = vpop.xlane.xlu0 %1541
        %1543 = vmax.xlane.f32.xlu0 %v1517
        %v1544 = vpop.xlane.xlu0 %1543
        %1545 = vmax.xlane.f32.xlu0 %v1518
        %v1546 = vpop.xlane.xlu0 %1545
        %1547 = vmax.xlane.f32.xlu0 %v1519
        %v1548 = vpop.xlane.xlu0 %1547
        %1549 = vmax.xlane.f32.xlu0 %v1520
        %v1550 = vpop.xlane.xlu0 %1549
        %1551 = vmax.xlane.f32.xlu0 %v1521
        %v1552 = vpop.xlane.xlu0 %1551
        %1553 = vmax.xlane.f32.xlu0 %v1522
        %v1554 = vpop.xlane.xlu0 %1553
        %v1555 = vsub.f32 %v1488, %v1524
        %v1556 = vsub.f32 %v1489, %v1526
        %v1557 = vsub.f32 %v1490, %v1528
        %v1558 = vsub.f32 %v1491, %v1530
        %v1559 = vsub.f32 %v1492, %v1532
        %v1560 = vsub.f32 %v1493, %v1534
        %v1561 = vsub.f32 %v1494, %v1536
        %v1562 = vsub.f32 %v1495, %v1538
        %v1563 = vsub.f32 %v1496, %v1540
        %v1564 = vsub.f32 %v1497, %v1542
        %v1565 = vsub.f32 %v1498, %v1544
        %v1566 = vsub.f32 %v1499, %v1546
        %v1567 = vsub.f32 %v1500, %v1548
        %v1568 = vsub.f32 %v1501, %v1550
        %v1569 = vsub.f32 %v1502, %v1552
        %v1570 = vsub.f32 %v1503, %v1554
        %v1571 = vmul.f32 %v1555, 1.442695
        %v1572 = vpow.pop %v1571
        %v1573 = vmul.f32 %v1556, 1.442695
        %v1574 = vpow.pop %v1573
        %v1575 = vmul.f32 %v1557, 1.442695
        %v1576 = vpow.pop %v1575
        %v1577 = vmul.f32 %v1558, 1.442695
        %v1578 = vpow.pop %v1577
        %v1579 = vmul.f32 %v1559, 1.442695
        %v1580 = vpow.pop %v1579
        %v1581 = vmul.f32 %v1560, 1.442695
        %v1582 = vpow.pop %v1581
        %v1583 = vmul.f32 %v1561, 1.442695
        %v1584 = vpow.pop %v1583
        %v1585 = vmul.f32 %v1562, 1.442695
        %v1586 = vpow.pop %v1585
        %v1587 = vmul.f32 %v1563, 1.442695
        %v1588 = vpow.pop %v1587
        %v1589 = vmul.f32 %v1564, 1.442695
        %v1590 = vpow.pop %v1589
        %v1591 = vmul.f32 %v1565, 1.442695
        %v1592 = vpow.pop %v1591
        %v1593 = vmul.f32 %v1566, 1.442695
        %v1594 = vpow.pop %v1593
        %v1595 = vmul.f32 %v1567, 1.442695
        %v1596 = vpow.pop %v1595
        %v1597 = vmul.f32 %v1568, 1.442695
        %v1598 = vpow.pop %v1597
        %v1599 = vmul.f32 %v1569, 1.442695
        %v1600 = vpow.pop %v1599
        %v1601 = vmul.f32 %v1570, 1.442695
        %v1602 = vpow.pop %v1601
        %v1603 = vsel %vm1506, %v1572, 0.0
        %v1604 = vsel %vm1506, %v1574, 0.0
        %v1605 = vsel %vm1506, %v1576, 0.0
        %v1606 = vsel %vm1506, %v1578, 0.0
        %v1607 = vsel %vm1506, %v1580, 0.0
        %v1608 = vsel %vm1506, %v1582, 0.0
        %v1609 = vsel %vm1506, %v1584, 0.0
        %v1610 = vsel %vm1506, %v1586, 0.0
        %v1611 = vsel %vm1506, %v1588, 0.0
        %v1612 = vsel %vm1506, %v1590, 0.0
        %v1613 = vsel %vm1506, %v1592, 0.0
        %v1614 = vsel %vm1506, %v1594, 0.0
        %v1615 = vsel %vm1506, %v1596, 0.0
        %v1616 = vsel %vm1506, %v1598, 0.0
        %v1617 = vsel %vm1506, %v1600, 0.0
        %v1618 = vsel %vm1506, %v1602, 0.0
        %1619 = vadd.xlane.f32.xlu0 %v1603
        %v1620 = vpop.xlane.xlu0 %1619
        %1621 = vadd.xlane.f32.xlu0 %v1604
        %v1622 = vpop.xlane.xlu0 %1621
        %1623 = vadd.xlane.f32.xlu0 %v1605
        %v1624 = vpop.xlane.xlu0 %1623
        %1625 = vadd.xlane.f32.xlu0 %v1606
        %v1626 = vpop.xlane.xlu0 %1625
        %1627 = vadd.xlane.f32.xlu0 %v1607
        %v1628 = vpop.xlane.xlu0 %1627
        %1629 = vadd.xlane.f32.xlu0 %v1608
        %v1630 = vpop.xlane.xlu0 %1629
        %1631 = vadd.xlane.f32.xlu0 %v1609
        %v1632 = vpop.xlane.xlu0 %1631
        %1633 = vadd.xlane.f32.xlu0 %v1610
        %v1634 = vpop.xlane.xlu0 %1633
        %1635 = vadd.xlane.f32.xlu0 %v1611
        %v1636 = vpop.xlane.xlu0 %1635
        %1637 = vadd.xlane.f32.xlu0 %v1612
        %v1638 = vpop.xlane.xlu0 %1637
        %1639 = vadd.xlane.f32.xlu0 %v1613
        %v1640 = vpop.xlane.xlu0 %1639
        %1641 = vadd.xlane.f32.xlu0 %v1614
        %v1642 = vpop.xlane.xlu0 %1641
        %1643 = vadd.xlane.f32.xlu0 %v1615
        %v1644 = vpop.xlane.xlu0 %1643
        %1645 = vadd.xlane.f32.xlu0 %v1616
        %v1646 = vpop.xlane.xlu0 %1645
        %1647 = vadd.xlane.f32.xlu0 %v1617
        %v1648 = vpop.xlane.xlu0 %1647
        %1649 = vadd.xlane.f32.xlu0 %v1618
        %v1650 = vpop.xlane.xlu0 %1649
        %v1651 = vrcp.pop %v1620
        %v1652 = vrcp.pop %v1622
        %v1653 = vrcp.pop %v1624
        %v1654 = vrcp.pop %v1626
        %v1655 = vrcp.pop %v1628
        %v1656 = vrcp.pop %v1630
        %v1657 = vrcp.pop %v1632
        %v1658 = vrcp.pop %v1634
        %v1659 = vrcp.pop %v1636
        %v1660 = vrcp.pop %v1638
        %v1661 = vrcp.pop %v1640
        %v1662 = vrcp.pop %v1642
        %v1663 = vrcp.pop %v1644
        %v1664 = vrcp.pop %v1646
        %v1665 = vrcp.pop %v1648
        %v1666 = vrcp.pop %v1650
        %v1667 = vmul.f32 %v1603, %v1651
        %v1668 = vmul.f32 %v1604, %v1652
        %v1669 = vmul.f32 %v1605, %v1653
        %v1670 = vmul.f32 %v1606, %v1654
        %v1671 = vmul.f32 %v1607, %v1655
        %v1672 = vmul.f32 %v1608, %v1656
        %v1673 = vmul.f32 %v1609, %v1657
        %v1674 = vmul.f32 %v1610, %v1658
        %v1675 = vmul.f32 %v1611, %v1659
        %v1676 = vmul.f32 %v1612, %v1660
        %v1677 = vmul.f32 %v1613, %v1661
        %v1678 = vmul.f32 %v1614, %v1662
        %v1679 = vmul.f32 %v1615, %v1663
        %v1680 = vmul.f32 %v1616, %v1664
        %v1681 = vmul.f32 %v1617, %v1665
        %v1682 = vmul.f32 %v1618, %v1666
        %v1683 = vlaneseq
        %v1684 = vshrl.u32 %v1683, 7
        %v1685 = vadd.s32 %v1684, 8
        %v1686 = vadd.s32 %v1684, 16
        %v1687 = vadd.s32 %v1684, 24
        %v1688 = vadd.s32 %v1684, 32
        %v1689 = vadd.s32 %v1684, 40
        %v1690 = vadd.s32 %v1684, 48
        %v1691 = vadd.s32 %v1684, 56
        %v1692 = vadd.s32 %v1684, 64
        %v1693 = vadd.s32 %v1684, 72
        %v1694 = vadd.s32 %v1684, 80
        %v1695 = vadd.s32 %v1684, 88
        %v1696 = vadd.s32 %v1684, 96
        %v1697 = vadd.s32 %v1684, 104
        %v1698 = vadd.s32 %v1684, 112
        %v1699 = vadd.s32 %v1684, 120
        %v1700 = vstv %s500
        %vm1701 = vcmp.lt.s32.totalorder %v1684, %v1700
        %vm1702 = vcmp.lt.s32.totalorder %v1685, %v1700
        %vm1703 = vcmp.lt.s32.totalorder %v1686, %v1700
        %vm1704 = vcmp.lt.s32.totalorder %v1687, %v1700
        %vm1705 = vcmp.lt.s32.totalorder %v1688, %v1700
        %vm1706 = vcmp.lt.s32.totalorder %v1689, %v1700
        %vm1707 = vcmp.lt.s32.totalorder %v1690, %v1700
        %vm1708 = vcmp.lt.s32.totalorder %v1691, %v1700
        %vm1709 = vcmp.lt.s32.totalorder %v1692, %v1700
        %vm1710 = vcmp.lt.s32.totalorder %v1693, %v1700
        %vm1711 = vcmp.lt.s32.totalorder %v1694, %v1700
        %vm1712 = vcmp.lt.s32.totalorder %v1695, %v1700
        %vm1713 = vcmp.lt.s32.totalorder %v1696, %v1700
        %vm1714 = vcmp.lt.s32.totalorder %v1697, %v1700
        %vm1715 = vcmp.lt.s32.totalorder %v1698, %v1700
        %vm1716 = vcmp.lt.s32.totalorder %v1699, %v1700
        %v1717 = vsel %vm1701, 1, 0
        %v1718 = vsel %vm1702, 1, 0
        %v1719 = vsel %vm1703, 1, 0
        %v1720 = vsel %vm1704, 1, 0
        %v1721 = vsel %vm1705, 1, 0
        %v1722 = vsel %vm1706, 1, 0
        %v1723 = vsel %vm1707, 1, 0
        %v1724 = vsel %vm1708, 1, 0
        %v1725 = vsel %vm1709, 1, 0
        %v1726 = vsel %vm1710, 1, 0
        %v1727 = vsel %vm1711, 1, 0
        %v1728 = vsel %vm1712, 1, 0
        %v1729 = vsel %vm1713, 1, 0
        %v1730 = vsel %vm1714, 1, 0
        %v1731 = vsel %vm1715, 1, 0
        %v1732 = vsel %vm1716, 1, 0
        %vm1733 = vcmp.eq.s32.totalorder %v1717, 1
        %vm1734 = vcmp.eq.s32.totalorder %v1718, 1
        %vm1735 = vcmp.eq.s32.totalorder %v1719, 1
        %vm1736 = vcmp.eq.s32.totalorder %v1720, 1
        %vm1737 = vcmp.eq.s32.totalorder %v1721, 1
        %vm1738 = vcmp.eq.s32.totalorder %v1722, 1
        %vm1739 = vcmp.eq.s32.totalorder %v1723, 1
        %vm1740 = vcmp.eq.s32.totalorder %v1724, 1
        %vm1741 = vcmp.eq.s32.totalorder %v1725, 1
        %vm1742 = vcmp.eq.s32.totalorder %v1726, 1
        %vm1743 = vcmp.eq.s32.totalorder %v1727, 1
        %vm1744 = vcmp.eq.s32.totalorder %v1728, 1
        %vm1745 = vcmp.eq.s32.totalorder %v1729, 1
        %vm1746 = vcmp.eq.s32.totalorder %v1730, 1
        %vm1747 = vcmp.eq.s32.totalorder %v1731, 1
        %vm1748 = vcmp.eq.s32.totalorder %v1732, 1
        %v1749 = vsel %vm1733, %v1667, 0.0
        %v1750 = vsel %vm1734, %v1668, 0.0
        %v1751 = vsel %vm1735, %v1669, 0.0
        %v1752 = vsel %vm1736, %v1670, 0.0
        %v1753 = vsel %vm1737, %v1671, 0.0
        %v1754 = vsel %vm1738, %v1672, 0.0
        %v1755 = vsel %vm1739, %v1673, 0.0
        %v1756 = vsel %vm1740, %v1674, 0.0
        %v1757 = vsel %vm1741, %v1675, 0.0
        %v1758 = vsel %vm1742, %v1676, 0.0
        %v1759 = vsel %vm1743, %v1677, 0.0
        %v1760 = vsel %vm1744, %v1678, 0.0
        %v1761 = vsel %vm1745, %v1679, 0.0
        %v1762 = vsel %vm1746, %v1680, 0.0
        %v1763 = vsel %vm1747, %v1681, 0.0
        %v1764 = vsel %vm1748, %v1682, 0.0
        %1765 = vxpose.xlu0.b32.start [1/16] %v1749, 128
        %1766 = vxpose.xlu0.b32.cont [2/16] %v1750, 128
        %1767 = vxpose.xlu0.b32.cont [3/16] %v1751, 128
        %1768 = vxpose.xlu0.b32.cont [4/16] %v1752, 128
        %1769 = vxpose.xlu0.b32.cont [5/16] %v1753, 128
        %1770 = vxpose.xlu0.b32.cont [6/16] %v1754, 128
        %1771 = vxpose.xlu0.b32.cont [7/16] %v1755, 128
        %1772 = vxpose.xlu0.b32.cont [8/16] %v1756, 128
        %1773 = vxpose.xlu0.b32.cont [9/16] %v1757, 128
        %1774 = vxpose.xlu0.b32.cont [10/16] %v1758, 128
        %1775 = vxpose.xlu0.b32.cont [11/16] %v1759, 128
        %1776 = vxpose.xlu0.b32.cont [12/16] %v1760, 128
        %1777 = vxpose.xlu0.b32.cont [13/16] %v1761, 128
        %1778 = vxpose.xlu0.b32.cont [14/16] %v1762, 128
        %1779 = vxpose.xlu0.b32.cont [15/16] %v1763, 128
        %1780 = vxpose.xlu0.b32.end [16/16] %v1764, 128
        %v1781 = vpop.trf.xlu0
        %v1782 = vpop.trf.xlu0
        %v1783 = vpop.trf.xlu0
        %v1784 = vpop.trf.xlu0
        %v1785 = vpop.trf.xlu0
        %v1786 = vpop.trf.xlu0
        %v1787 = vpop.trf.xlu0
        %v1788 = vpop.trf.xlu0
        %v1789 = vpop.trf.xlu0
        %v1790 = vpop.trf.xlu0
        %v1791 = vpop.trf.xlu0
        %v1792 = vpop.trf.xlu0
        %v1793 = vpop.trf.xlu0
        %v1794 = vpop.trf.xlu0
        %v1795 = vpop.trf.xlu0
        %v1796 = vpop.trf.xlu0
        %1797 = vmatprep.subr.mxu0 0.0
        %1798 = vmatpush1.msra.mxu0 %v1127
        %1799 = vmatprep.subr.mxu0 0.0
        %1800 = vmatpush1.msra.mxu0 %v1128
        %1801 = vmatprep.subr.mxu0 0.0
        %1802 = vmatpush1.msra.mxu0 %v1129
        %1803 = vmatprep.subr.mxu0 0.0
        %1804 = vmatpush1.msra.mxu0 %v1130
        %1805 = vmatprep.subr.mxu0 0.0
        %1806 = vmatpush1.msra.mxu0 %v1131
        %1807 = vmatprep.subr.mxu0 0.0
        %1808 = vmatpush1.msra.mxu0 %v1132
        %1809 = vmatprep.subr.mxu0 0.0
        %1810 = vmatpush1.msra.mxu0 %v1133
        %1811 = vmatprep.subr.mxu0 0.0
        %1812 = vmatpush1.msra.mxu0 %v1134
        %1813 = vmatprep.subr.mxu0 0.0
        %1814 = vmatpush1.msra.mxu0 %v1135
        %1815 = vmatprep.subr.mxu0 0.0
        %1816 = vmatpush1.msra.mxu0 %v1136
        %1817 = vmatprep.subr.mxu0 0.0
        %1818 = vmatpush1.msra.mxu0 %v1137
        %1819 = vmatprep.subr.mxu0 0.0
        %1820 = vmatpush1.msra.mxu0 %v1138
        %1821 = vmatprep.subr.mxu0 0.0
        %1822 = vmatpush1.msra.mxu0 %v1139
        %1823 = vmatprep.subr.mxu0 0.0
        %1824 = vmatpush1.msra.mxu0 %v1140
        %1825 = vmatprep.subr.mxu0 0.0
        %1826 = vmatpush1.msra.mxu0 %v1141
        %1827 = vmatprep.subr.mxu0 0.0
        %1828 = vmatpush1.msra.mxu0 %v1142
        %1829 = vmatprep.subr.mxu0 0.0
        %1830 = vmatpush1.msra.mxu0 0.0
        %1831 = vmatprep.subr.mxu0 0.0
        %1832 = vmatpush1.msra.mxu0 0.0
        %1833 = vmatprep.subr.mxu0 0.0
        %1834 = vmatpush1.msra.mxu0 0.0
        %1835 = vmatprep.subr.mxu0 0.0
        %1836 = vmatpush1.msra.mxu0 0.0
        %1837 = vmatprep.subr.mxu0 0.0
        %1838 = vmatpush1.msra.mxu0 0.0
        %1839 = vmatprep.subr.mxu0 0.0
        %1840 = vmatpush1.msra.mxu0 0.0
        %1841 = vmatprep.subr.mxu0 0.0
        %1842 = vmatpush1.msra.mxu0 0.0
        %1843 = vmatprep.subr.mxu0 0.0
        %1844 = vmatpush1.msra.mxu0 0.0
        %1845 = vmatprep.subr.mxu0 0.0
        %1846 = vmatpush1.msra.mxu0 0.0
        %1847 = vmatprep.subr.mxu0 0.0
        %1848 = vmatpush1.msra.mxu0 0.0
        %1849 = vmatprep.subr.mxu0 0.0
        %1850 = vmatpush1.msra.mxu0 0.0
        %1851 = vmatprep.subr.mxu0 0.0
        %1852 = vmatpush1.msra.mxu0 0.0
        %1853 = vmatprep.subr.mxu0 0.0
        %1854 = vmatpush1.msra.mxu0 0.0
        %1855 = vmatprep.subr.mxu0 0.0
        %1856 = vmatpush1.msra.mxu0 0.0
        %1857 = vmatprep.subr.mxu0 0.0
        %1858 = vmatpush1.msra.mxu0 0.0
        %1859 = vmatprep.subr.mxu0 0.0
        %1860 = vmatpush1.msra.mxu0 0.0
        %1861 = vmatprep.mubr.f32.mxu0 0.0
        %1862 = vmatmul.mubr.f32.gmra.mrb[0].mxu0 %v1781
        %v1863 = vpop.f32.mrb[0].mxu0
        %v1864 = vadd.f32 0.0, %v1863
        %v1865 = vpop.f32.mrb[0].mxu0
        %1866 = vmatprep.mubr.f32.mxu0 0.0
        %1867 = vmatmul.mubr.f32.gmra.mrb[0].mxu0 %v1782
        %v1868 = vpop.f32.mrb[0].mxu0
        %v1869 = vadd.f32 0.0, %v1868
        %v1870 = vpop.f32.mrb[0].mxu0
        %1871 = vmatprep.mubr.f32.mxu0 0.0
        %1872 = vmatmul.mubr.f32.gmra.mrb[0].mxu0 %v1783
        %v1873 = vpop.f32.mrb[0].mxu0
        %v1874 = vadd.f32 0.0, %v1873
        %v1875 = vpop.f32.mrb[0].mxu0
        %1876 = vmatprep.mubr.f32.mxu0 0.0
        %1877 = vmatmul.mubr.f32.gmra.mrb[0].mxu0 %v1784
        %v1878 = vpop.f32.mrb[0].mxu0
        %v1879 = vadd.f32 0.0, %v1878
        %v1880 = vpop.f32.mrb[0].mxu0
        %1881 = vmatprep.mubr.f32.mxu0 0.0
        %1882 = vmatmul.mubr.f32.gmra.mrb[0].mxu0 %v1785
        %v1883 = vpop.f32.mrb[0].mxu0
        %v1884 = vadd.f32 0.0, %v1883
        %v1885 = vpop.f32.mrb[0].mxu0
        %1886 = vmatprep.mubr.f32.mxu0 0.0
        %1887 = vmatmul.mubr.f32.gmra.mrb[0].mxu0 %v1786
        %v1888 = vpop.f32.mrb[0].mxu0
        %v1889 = vadd.f32 0.0, %v1888
        %v1890 = vpop.f32.mrb[0].mxu0
        %1891 = vmatprep.mubr.f32.mxu0 0.0
        %1892 = vmatmul.mubr.f32.gmra.mrb[0].mxu0 %v1787
        %v1893 = vpop.f32.mrb[0].mxu0
        %v1894 = vadd.f32 0.0, %v1893
        %v1895 = vpop.f32.mrb[0].mxu0
        %1896 = vmatprep.mubr.f32.mxu0 0.0
        %1897 = vmatmul.mubr.f32.gmra.mrb[0].mxu0 %v1788
        %v1898 = vpop.f32.mrb[0].mxu0
        %v1899 = vadd.f32 0.0, %v1898
        %v1900 = vpop.f32.mrb[0].mxu0
        %1901 = vmatprep.mubr.f32.mxu0 0.0
        %1902 = vmatmul.mubr.f32.gmra.mrb[0].mxu0 %v1789
        %v1903 = vpop.f32.mrb[0].mxu0
        %v1904 = vadd.f32 0.0, %v1903
        %v1905 = vpop.f32.mrb[0].mxu0
        %1906 = vmatprep.mubr.f32.mxu0 0.0
        %1907 = vmatmul.mubr.f32.gmra.mrb[0].mxu0 %v1790
        %v1908 = vpop.f32.mrb[0].mxu0
        %v1909 = vadd.f32 0.0, %v1908
        %v1910 = vpop.f32.mrb[0].mxu0
        %1911 = vmatprep.mubr.f32.mxu0 0.0
        %1912 = vmatmul.mubr.f32.gmra.mrb[0].mxu0 %v1791
        %v1913 = vpop.f32.mrb[0].mxu0
        %v1914 = vadd.f32 0.0, %v1913
        %v1915 = vpop.f32.mrb[0].mxu0
        %1916 = vmatprep.mubr.f32.mxu0 0.0
        %1917 = vmatmul.mubr.f32.gmra.mrb[0].mxu0 %v1792
        %v1918 = vpop.f32.mrb[0].mxu0
        %v1919 = vadd.f32 0.0, %v1918
        %v1920 = vpop.f32.mrb[0].mxu0
        %1921 = vmatprep.mubr.f32.mxu0 0.0
        %1922 = vmatmul.mubr.f32.gmra.mrb[0].mxu0 %v1793
        %v1923 = vpop.f32.mrb[0].mxu0
        %v1924 = vadd.f32 0.0, %v1923
        %v1925 = vpop.f32.mrb[0].mxu0
        %1926 = vmatprep.mubr.f32.mxu0 0.0
        %1927 = vmatmul.mubr.f32.gmra.mrb[0].mxu0 %v1794
        %v1928 = vpop.f32.mrb[0].mxu0
        %v1929 = vadd.f32 0.0, %v1928
        %v1930 = vpop.f32.mrb[0].mxu0
        %1931 = vmatprep.mubr.f32.mxu0 0.0
        %1932 = vmatmul.mubr.f32.gmra.mrb[0].mxu0 %v1795
        %v1933 = vpop.f32.mrb[0].mxu0
        %v1934 = vadd.f32 0.0, %v1933
        %v1935 = vpop.f32.mrb[0].mxu0
        %1936 = vmatprep.mubr.f32.mxu0 0.0
        %1937 = vmatmul.mubr.f32.gmra.mrb[0].mxu0 %v1796
        %v1938 = vpop.f32.mrb[0].mxu0
        %v1939 = vadd.f32 0.0, %v1938
        %v1940 = vpop.f32.mrb[0].mxu0
        %1941 = vdwg.mxu0
        %1942 = vst [vmem:[%s491] sm:$0xff] %v1864
        %1943 = vst [vmem:[%s491 + $0x8] sm:$0xff] %v1869
        %1944 = vst [vmem:[%s491 + $0x10] sm:$0xff] %v1874
        %1945 = vst [vmem:[%s491 + $0x18] sm:$0xff] %v1879
        %1946 = vst [vmem:[%s491 + $0x20] sm:$0xff] %v1884
        %1947 = vst [vmem:[%s491 + $0x28] sm:$0xff] %v1889
        %1948 = vst [vmem:[%s491 + $0x30] sm:$0xff] %v1894
        %1949 = vst [vmem:[%s491 + $0x38] sm:$0xff] %v1899
        %1950 = vst [vmem:[%s491 + $0x40] sm:$0xff] %v1904
        %1951 = vst [vmem:[%s491 + $0x48] sm:$0xff] %v1909
        %1952 = vst [vmem:[%s491 + $0x50] sm:$0xff] %v1914
        %1953 = vst [vmem:[%s491 + $0x58] sm:$0xff] %v1919
        %1954 = vst [vmem:[%s491 + $0x60] sm:$0xff] %v1924
        %1955 = vst [vmem:[%s491 + $0x68] sm:$0xff] %v1929
        %1956 = vst [vmem:[%s491 + $0x70] sm:$0xff] %v1934
        %1957 = vst [vmem:[%s491 + $0x78] sm:$0xff] %v1939
        %v1958 = vpack.c.bf16 %v1750, %v1749
        %v1959 = vpack.c.bf16 %v1752, %v1751
        %v1960 = vpack.c.bf16 %v1754, %v1753
        %v1961 = vpack.c.bf16 %v1756, %v1755
        %v1962 = vpack.c.bf16 %v1758, %v1757
        %v1963 = vpack.c.bf16 %v1760, %v1759
        %v1964 = vpack.c.bf16 %v1762, %v1761
        %v1965 = vpack.c.bf16 %v1764, %v1763
        %1966 = vmatprep.subr.bf16.mxu0 0
        %1967 = vmatpush1.bf16.msra.mxu0 %v1958
        %1968 = vmatprep.subr.bf16.mxu0 0
        %1969 = vmatpush1.bf16.msra.mxu0 %v1959
        %1970 = vmatprep.subr.bf16.mxu0 0
        %1971 = vmatpush1.bf16.msra.mxu0 %v1960
        %1972 = vmatprep.subr.bf16.mxu0 0
        %1973 = vmatpush1.bf16.msra.mxu0 %v1961
        %1974 = vmatprep.subr.bf16.mxu0 0
        %1975 = vmatpush1.bf16.msra.mxu0 %v1962
        %1976 = vmatprep.subr.bf16.mxu0 0
        %1977 = vmatpush1.bf16.msra.mxu0 %v1963
        %1978 = vmatprep.subr.bf16.mxu0 0
        %1979 = vmatpush1.bf16.msra.mxu0 %v1964
        %1980 = vmatprep.subr.bf16.mxu0 0
        %1981 = vmatpush1.bf16.msra.mxu0 %v1965
        %1982 = vmatprep.subr.bf16.mxu0 0
        %1983 = vmatpush1.bf16.msra.mxu0 0
        %1984 = vmatprep.subr.bf16.mxu0 0
        %1985 = vmatpush1.bf16.msra.mxu0 0
        %1986 = vmatprep.subr.bf16.mxu0 0
        %1987 = vmatpush1.bf16.msra.mxu0 0
        %1988 = vmatprep.subr.bf16.mxu0 0
        %1989 = vmatpush1.bf16.msra.mxu0 0
        %1990 = vmatprep.subr.bf16.mxu0 0
        %1991 = vmatpush1.bf16.msra.mxu0 0
        %1992 = vmatprep.subr.bf16.mxu0 0
        %1993 = vmatpush1.bf16.msra.mxu0 0
        %1994 = vmatprep.subr.bf16.mxu0 0
        %1995 = vmatpush1.bf16.msra.mxu0 0
        %1996 = vmatprep.subr.bf16.mxu0 0
        %1997 = vmatpush1.bf16.msra.mxu0 0
        %1998 = vmatprep.mubr.bf16.mxu0 0
        %1999 = vmatmul.mubr.bf16.gmra.mrb[0].mxu0 %v621
        %v2000 = vpop.f32.mrb[0].mxu0
        %v2001 = vadd.f32 0.0, %v2000
        %v2002 = vpop.f32.mrb[0].mxu0
        %v2003 = vpop.f32.mrb[0].mxu0
        %v2004 = vadd.f32 0.0, %v2003
        %v2005 = vpop.f32.mrb[0].mxu0
        %2006 = vmatprep.mubr.bf16.mxu0 0
        %2007 = vmatmul.mubr.bf16.gmra.mrb[0].mxu0 %v622
        %v2008 = vpop.f32.mrb[0].mxu0
        %v2009 = vadd.f32 0.0, %v2008
        %v2010 = vpop.f32.mrb[0].mxu0
        %v2011 = vpop.f32.mrb[0].mxu0
        %v2012 = vadd.f32 0.0, %v2011
        %v2013 = vpop.f32.mrb[0].mxu0
        %2014 = vmatprep.mubr.bf16.mxu0 0
        %2015 = vmatmul.mubr.bf16.gmra.mrb[0].mxu0 %v623
        %v2016 = vpop.f32.mrb[0].mxu0
        %v2017 = vadd.f32 0.0, %v2016
        %v2018 = vpop.f32.mrb[0].mxu0
        %v2019 = vpop.f32.mrb[0].mxu0
        %v2020 = vadd.f32 0.0, %v2019
        %v2021 = vpop.f32.mrb[0].mxu0
        %2022 = vmatprep.mubr.bf16.mxu0 0
        %2023 = vmatmul.mubr.bf16.gmra.mrb[0].mxu0 %v624
        %v2024 = vpop.f32.mrb[0].mxu0
        %v2025 = vadd.f32 0.0, %v2024
        %v2026 = vpop.f32.mrb[0].mxu0
        %v2027 = vpop.f32.mrb[0].mxu0
        %v2028 = vadd.f32 0.0, %v2027
        %v2029 = vpop.f32.mrb[0].mxu0
        %2030 = vmatprep.mubr.bf16.mxu0 0
        %2031 = vmatmul.mubr.bf16.gmra.mrb[0].mxu0 %v625
        %v2032 = vpop.f32.mrb[0].mxu0
        %v2033 = vadd.f32 0.0, %v2032
        %v2034 = vpop.f32.mrb[0].mxu0
        %v2035 = vpop.f32.mrb[0].mxu0
        %v2036 = vadd.f32 0.0, %v2035
        %v2037 = vpop.f32.mrb[0].mxu0
        %2038 = vmatprep.mubr.bf16.mxu0 0
        %2039 = vmatmul.mubr.bf16.gmra.mrb[0].mxu0 %v626
        %v2040 = vpop.f32.mrb[0].mxu0
        %v2041 = vadd.f32 0.0, %v2040
        %v2042 = vpop.f32.mrb[0].mxu0
        %v2043 = vpop.f32.mrb[0].mxu0
        %v2044 = vadd.f32 0.0, %v2043
        %v2045 = vpop.f32.mrb[0].mxu0
        %2046 = vmatprep.mubr.bf16.mxu0 0
        %2047 = vmatmul.mubr.bf16.gmra.mrb[0].mxu0 %v627
        %v2048 = vpop.f32.mrb[0].mxu0
        %v2049 = vadd.f32 0.0, %v2048
        %v2050 = vpop.f32.mrb[0].mxu0
        %v2051 = vpop.f32.mrb[0].mxu0
        %v2052 = vadd.f32 0.0, %v2051
        %v2053 = vpop.f32.mrb[0].mxu0
        %2054 = vmatprep.mubr.bf16.mxu0 0
        %2055 = vmatmul.mubr.bf16.gmra.mrb[0].mxu0 %v628
        %v2056 = vpop.f32.mrb[0].mxu0
        %v2057 = vadd.f32 0.0, %v2056
        %v2058 = vpop.f32.mrb[0].mxu0
        %v2059 = vpop.f32.mrb[0].mxu0
        %v2060 = vadd.f32 0.0, %v2059
        %v2061 = vpop.f32.mrb[0].mxu0
        %2062 = vdwg.mxu0
        %2063 = vmatprep.subr.mxu0 0.0
        %2064 = vmatpush1.msra.mxu0 %v2001
        %2065 = vmatprep.subr.mxu0 0.0
        %2066 = vmatpush1.msra.mxu0 %v2004
        %2067 = vmatprep.subr.mxu0 0.0
        %2068 = vmatpush1.msra.mxu0 %v2009
        %2069 = vmatprep.subr.mxu0 0.0
        %2070 = vmatpush1.msra.mxu0 %v2012
        %2071 = vmatprep.subr.mxu0 0.0
        %2072 = vmatpush1.msra.mxu0 %v2017
        %2073 = vmatprep.subr.mxu0 0.0
        %2074 = vmatpush1.msra.mxu0 %v2020
        %2075 = vmatprep.subr.mxu0 0.0
        %2076 = vmatpush1.msra.mxu0 %v2025
        %2077 = vmatprep.subr.mxu0 0.0
        %2078 = vmatpush1.msra.mxu0 %v2028
        %2079 = vmatprep.subr.mxu0 0.0
        %2080 = vmatpush1.msra.mxu0 %v2033
        %2081 = vmatprep.subr.mxu0 0.0
        %2082 = vmatpush1.msra.mxu0 %v2036
        %2083 = vmatprep.subr.mxu0 0.0
        %2084 = vmatpush1.msra.mxu0 %v2041
        %2085 = vmatprep.subr.mxu0 0.0
        %2086 = vmatpush1.msra.mxu0 %v2044
        %2087 = vmatprep.subr.mxu0 0.0
        %2088 = vmatpush1.msra.mxu0 %v2049
        %2089 = vmatprep.subr.mxu0 0.0
        %2090 = vmatpush1.msra.mxu0 %v2052
        %2091 = vmatprep.subr.mxu0 0.0
        %2092 = vmatpush1.msra.mxu0 %v2057
        %2093 = vmatprep.subr.mxu0 0.0
        %2094 = vmatpush1.msra.mxu0 %v2060
        %2095 = vmatprep.subr.mxu0 0.0
        %2096 = vmatpush1.msra.mxu0 0.0
        %2097 = vmatprep.subr.mxu0 0.0
        %2098 = vmatpush1.msra.mxu0 0.0
        %2099 = vmatprep.subr.mxu0 0.0
        %2100 = vmatpush1.msra.mxu0 0.0
        %2101 = vmatprep.subr.mxu0 0.0
        %2102 = vmatpush1.msra.mxu0 0.0
        %2103 = vmatprep.subr.mxu0 0.0
        %2104 = vmatpush1.msra.mxu0 0.0
        %2105 = vmatprep.subr.mxu0 0.0
        %2106 = vmatpush1.msra.mxu0 0.0
        %2107 = vmatprep.subr.mxu0 0.0
        %2108 = vmatpush1.msra.mxu0 0.0
        %2109 = vmatprep.subr.mxu0 0.0
        %2110 = vmatpush1.msra.mxu0 0.0
        %2111 = vmatprep.subr.mxu0 0.0
        %2112 = vmatpush1.msra.mxu0 0.0
        %2113 = vmatprep.subr.mxu0 0.0
        %2114 = vmatpush1.msra.mxu0 0.0
        %2115 = vmatprep.subr.mxu0 0.0
        %2116 = vmatpush1.msra.mxu0 0.0
        %2117 = vmatprep.subr.mxu0 0.0
        %2118 = vmatpush1.msra.mxu0 0.0
        %2119 = vmatprep.subr.mxu0 0.0
        %2120 = vmatpush1.msra.mxu0 0.0
        %2121 = vmatprep.subr.mxu0 0.0
        %2122 = vmatpush1.msra.mxu0 0.0
        %2123 = vmatprep.subr.mxu0 0.0
        %2124 = vmatpush1.msra.mxu0 0.0
        %2125 = vmatprep.subr.mxu0 0.0
        %2126 = vmatpush1.msra.mxu0 0.0
        %2127 = vmatprep.mubr.f32.mxu0 0.0
        %2128 = vmatmul.mubr.f32.gmra.mrb[0].mxu0 %v1781
        %v2129 = vpop.f32.mrb[0].mxu0
        %v2130 = vadd.f32 0.0, %v2129
        %v2131 = vpop.f32.mrb[0].mxu0
        %2132 = vmatprep.mubr.f32.mxu0 0.0
        %2133 = vmatmul.mubr.f32.gmra.mrb[0].mxu0 %v1782
        %v2134 = vpop.f32.mrb[0].mxu0
        %v2135 = vadd.f32 0.0, %v2134
        %v2136 = vpop.f32.mrb[0].mxu0
        %2137 = vmatprep.mubr.f32.mxu0 0.0
        %2138 = vmatmul.mubr.f32.gmra.mrb[0].mxu0 %v1783
        %v2139 = vpop.f32.mrb[0].mxu0
        %v2140 = vadd.f32 0.0, %v2139
        %v2141 = vpop.f32.mrb[0].mxu0
        %2142 = vmatprep.mubr.f32.mxu0 0.0
        %2143 = vmatmul.mubr.f32.gmra.mrb[0].mxu0 %v1784
        %v2144 = vpop.f32.mrb[0].mxu0
        %v2145 = vadd.f32 0.0, %v2144
        %v2146 = vpop.f32.mrb[0].mxu0
        %2147 = vmatprep.mubr.f32.mxu0 0.0
        %2148 = vmatmul.mubr.f32.gmra.mrb[0].mxu0 %v1785
        %v2149 = vpop.f32.mrb[0].mxu0
        %v2150 = vadd.f32 0.0, %v2149
        %v2151 = vpop.f32.mrb[0].mxu0
        %2152 = vmatprep.mubr.f32.mxu0 0.0
        %2153 = vmatmul.mubr.f32.gmra.mrb[0].mxu0 %v1786
        %v2154 = vpop.f32.mrb[0].mxu0
        %v2155 = vadd.f32 0.0, %v2154
        %v2156 = vpop.f32.mrb[0].mxu0
        %2157 = vmatprep.mubr.f32.mxu0 0.0
        %2158 = vmatmul.mubr.f32.gmra.mrb[0].mxu0 %v1787
        %v2159 = vpop.f32.mrb[0].mxu0
        %v2160 = vadd.f32 0.0, %v2159
        %v2161 = vpop.f32.mrb[0].mxu0
        %2162 = vmatprep.mubr.f32.mxu0 0.0
        %2163 = vmatmul.mubr.f32.gmra.mrb[0].mxu0 %v1788
        %v2164 = vpop.f32.mrb[0].mxu0
        %v2165 = vadd.f32 0.0, %v2164
        %v2166 = vpop.f32.mrb[0].mxu0
        %2167 = vmatprep.mubr.f32.mxu0 0.0
        %2168 = vmatmul.mubr.f32.gmra.mrb[0].mxu0 %v1789
        %v2169 = vpop.f32.mrb[0].mxu0
        %v2170 = vadd.f32 0.0, %v2169
        %v2171 = vpop.f32.mrb[0].mxu0
        %2172 = vmatprep.mubr.f32.mxu0 0.0
        %2173 = vmatmul.mubr.f32.gmra.mrb[0].mxu0 %v1790
        %v2174 = vpop.f32.mrb[0].mxu0
        %v2175 = vadd.f32 0.0, %v2174
        %v2176 = vpop.f32.mrb[0].mxu0
        %2177 = vmatprep.mubr.f32.mxu0 0.0
        %2178 = vmatmul.mubr.f32.gmra.mrb[0].mxu0 %v1791
        %v2179 = vpop.f32.mrb[0].mxu0
        %v2180 = vadd.f32 0.0, %v2179
        %v2181 = vpop.f32.mrb[0].mxu0
        %2182 = vmatprep.mubr.f32.mxu0 0.0
        %2183 = vmatmul.mubr.f32.gmra.mrb[0].mxu0 %v1792
        %v2184 = vpop.f32.mrb[0].mxu0
        %v2185 = vadd.f32 0.0, %v2184
        %v2186 = vpop.f32.mrb[0].mxu0
        %2187 = vmatprep.mubr.f32.mxu0 0.0
        %2188 = vmatmul.mubr.f32.gmra.mrb[0].mxu0 %v1793
        %v2189 = vpop.f32.mrb[0].mxu0
        %v2190 = vadd.f32 0.0, %v2189
        %v2191 = vpop.f32.mrb[0].mxu0
        %2192 = vmatprep.mubr.f32.mxu0 0.0
        %2193 = vmatmul.mubr.f32.gmra.mrb[0].mxu0 %v1794
        %v2194 = vpop.f32.mrb[0].mxu0
        %v2195 = vadd.f32 0.0, %v2194
        %v2196 = vpop.f32.mrb[0].mxu0
        %2197 = vmatprep.mubr.f32.mxu0 0.0
        %2198 = vmatmul.mubr.f32.gmra.mrb[0].mxu0 %v1795
        %v2199 = vpop.f32.mrb[0].mxu0
        %v2200 = vadd.f32 0.0, %v2199
        %v2201 = vpop.f32.mrb[0].mxu0
        %2202 = vmatprep.mubr.f32.mxu0 0.0
        %2203 = vmatmul.mubr.f32.gmra.mrb[0].mxu0 %v1796
        %v2204 = vpop.f32.mrb[0].mxu0
        %v2205 = vadd.f32 0.0, %v2204
        %v2206 = vpop.f32.mrb[0].mxu0
        %2207 = vdwg.mxu0
        %2208 = vst [vmem:[%s484] sm:$0xff] %v2130
        %2209 = vst [vmem:[%s484 + $0x8] sm:$0xff] %v2135
        %2210 = vst [vmem:[%s484 + $0x10] sm:$0xff] %v2140
        %2211 = vst [vmem:[%s484 + $0x18] sm:$0xff] %v2145
        %2212 = vst [vmem:[%s484 + $0x20] sm:$0xff] %v2150
        %2213 = vst [vmem:[%s484 + $0x28] sm:$0xff] %v2155
        %2214 = vst [vmem:[%s484 + $0x30] sm:$0xff] %v2160
        %2215 = vst [vmem:[%s484 + $0x38] sm:$0xff] %v2165
        %2216 = vst [vmem:[%s484 + $0x40] sm:$0xff] %v2170
        %2217 = vst [vmem:[%s484 + $0x48] sm:$0xff] %v2175
        %2218 = vst [vmem:[%s484 + $0x50] sm:$0xff] %v2180
        %2219 = vst [vmem:[%s484 + $0x58] sm:$0xff] %v2185
        %2220 = vst [vmem:[%s484 + $0x60] sm:$0xff] %v2190
        %2221 = vst [vmem:[%s484 + $0x68] sm:$0xff] %v2195
        %2222 = vst [vmem:[%s484 + $0x70] sm:$0xff] %v2200
        %2223 = vst [vmem:[%s484 + $0x78] sm:$0xff] %v2205
        %vm2224 = vcmp.gt.f32.partialorder %v1749, 0.0
        %vm2225 = vcmp.gt.f32.partialorder %v1750, 0.0
        %vm2226 = vcmp.gt.f32.partialorder %v1751, 0.0
        %vm2227 = vcmp.gt.f32.partialorder %v1752, 0.0
        %vm2228 = vcmp.gt.f32.partialorder %v1753, 0.0
        %vm2229 = vcmp.gt.f32.partialorder %v1754, 0.0
        %vm2230 = vcmp.gt.f32.partialorder %v1755, 0.0
        %vm2231 = vcmp.gt.f32.partialorder %v1756, 0.0
        %vm2232 = vcmp.gt.f32.partialorder %v1757, 0.0
        %vm2233 = vcmp.gt.f32.partialorder %v1758, 0.0
        %vm2234 = vcmp.gt.f32.partialorder %v1759, 0.0
        %vm2235 = vcmp.gt.f32.partialorder %v1760, 0.0
        %vm2236 = vcmp.gt.f32.partialorder %v1761, 0.0
        %vm2237 = vcmp.gt.f32.partialorder %v1762, 0.0
        %vm2238 = vcmp.gt.f32.partialorder %v1763, 0.0
        %vm2239 = vcmp.gt.f32.partialorder %v1764, 0.0
        %v2240 = vmax.f32 %v1749, 1e-30
        %v2241 = vmax.f32 %v1750, 1e-30
        %v2242 = vmax.f32 %v1751, 1e-30
        %v2243 = vmax.f32 %v1752, 1e-30
        %v2244 = vmax.f32 %v1753, 1e-30
        %v2245 = vmax.f32 %v1754, 1e-30
        %v2246 = vmax.f32 %v1755, 1e-30
        %v2247 = vmax.f32 %v1756, 1e-30
        %v2248 = vmax.f32 %v1757, 1e-30
        %v2249 = vmax.f32 %v1758, 1e-30
        %v2250 = vmax.f32 %v1759, 1e-30
        %v2251 = vmax.f32 %v1760, 1e-30
        %v2252 = vmax.f32 %v1761, 1e-30
        %v2253 = vmax.f32 %v1762, 1e-30
        %v2254 = vmax.f32 %v1763, 1e-30
        %v2255 = vmax.f32 %v1764, 1e-30
        %v2256 = vlog2.pop %v2240
        %v2257 = vmul.f32 %v2256, 0.6931472
        %v2258 = vlog2.pop %v2241
        %v2259 = vmul.f32 %v2258, 0.6931472
        %v2260 = vlog2.pop %v2242
        %v2261 = vmul.f32 %v2260, 0.6931472
        %v2262 = vlog2.pop %v2243
        %v2263 = vmul.f32 %v2262, 0.6931472
        %v2264 = vlog2.pop %v2244
        %v2265 = vmul.f32 %v2264, 0.6931472
        %v2266 = vlog2.pop %v2245
        %v2267 = vmul.f32 %v2266, 0.6931472
        %v2268 = vlog2.pop %v2246
        %v2269 = vmul.f32 %v2268, 0.6931472
        %v2270 = vlog2.pop %v2247
        %v2271 = vmul.f32 %v2270, 0.6931472
        %v2272 = vlog2.pop %v2248
        %v2273 = vmul.f32 %v2272, 0.6931472
        %v2274 = vlog2.pop %v2249
        %v2275 = vmul.f32 %v2274, 0.6931472
        %v2276 = vlog2.pop %v2250
        %v2277 = vmul.f32 %v2276, 0.6931472
        %v2278 = vlog2.pop %v2251
        %v2279 = vmul.f32 %v2278, 0.6931472
        %v2280 = vlog2.pop %v2252
        %v2281 = vmul.f32 %v2280, 0.6931472
        %v2282 = vlog2.pop %v2253
        %v2283 = vmul.f32 %v2282, 0.6931472
        %v2284 = vlog2.pop %v2254
        %v2285 = vmul.f32 %v2284, 0.6931472
        %v2286 = vlog2.pop %v2255
        %v2287 = vmul.f32 %v2286, 0.6931472
        %v2288 = vsel %vm2224, %v2257, 0.0
        %v2289 = vsel %vm2225, %v2259, 0.0
        %v2290 = vsel %vm2226, %v2261, 0.0
        %v2291 = vsel %vm2227, %v2263, 0.0
        %v2292 = vsel %vm2228, %v2265, 0.0
        %v2293 = vsel %vm2229, %v2267, 0.0
        %v2294 = vsel %vm2230, %v2269, 0.0
        %v2295 = vsel %vm2231, %v2271, 0.0
        %v2296 = vsel %vm2232, %v2273, 0.0
        %v2297 = vsel %vm2233, %v2275, 0.0
        %v2298 = vsel %vm2234, %v2277, 0.0
        %v2299 = vsel %vm2235, %v2279, 0.0
        %v2300 = vsel %vm2236, %v2281, 0.0
        %v2301 = vsel %vm2237, %v2283, 0.0
        %v2302 = vsel %vm2238, %v2285, 0.0
        %v2303 = vsel %vm2239, %v2287, 0.0
        %v2304 = vmul.f32 %v1749, %v2288
        %v2305 = vmul.f32 %v1750, %v2289
        %v2306 = vmul.f32 %v1751, %v2290
        %v2307 = vmul.f32 %v1752, %v2291
        %v2308 = vmul.f32 %v1753, %v2292
        %v2309 = vmul.f32 %v1754, %v2293
        %v2310 = vmul.f32 %v1755, %v2294
        %v2311 = vmul.f32 %v1756, %v2295
        %v2312 = vmul.f32 %v1757, %v2296
        %v2313 = vmul.f32 %v1758, %v2297
        %v2314 = vmul.f32 %v1759, %v2298
        %v2315 = vmul.f32 %v1760, %v2299
        %v2316 = vmul.f32 %v1761, %v2300
        %v2317 = vmul.f32 %v1762, %v2301
        %v2318 = vmul.f32 %v1763, %v2302
        %v2319 = vmul.f32 %v1764, %v2303
        %v2320 = vadd.f32 %v2304, %v2305
        %v2321 = vadd.f32 %v2320, %v2306
        %v2322 = vadd.f32 %v2321, %v2307
        %v2323 = vadd.f32 %v2322, %v2308
        %v2324 = vadd.f32 %v2323, %v2309
        %v2325 = vadd.f32 %v2324, %v2310
        %v2326 = vadd.f32 %v2325, %v2311
        %v2327 = vadd.f32 %v2326, %v2312
        %v2328 = vadd.f32 %v2327, %v2313
        %v2329 = vadd.f32 %v2328, %v2314
        %v2330 = vadd.f32 %v2329, %v2315
        %v2331 = vadd.f32 %v2330, %v2316
        %v2332 = vadd.f32 %v2331, %v2317
        %v2333 = vadd.f32 %v2332, %v2318
        %v2334 = vadd.f32 %v2333, %v2319
        %2335 = vadd.xlane.f32.xlu0 %v2334
        %v2336 = vpop.xlane.xlu0 %2335
        %v2337 = vrot.slane %v2336, 4
        %v2338 = vadd.f32 %v2336, %v2337
        %v2339 = vrot.slane %v2338, 2
        %v2340 = vadd.f32 %v2338, %v2339
        %v2341 = vrot.slane %v2340, 1
        %v2342 = vadd.f32 %v2340, %v2341
        %s2343 = vtos %v2342
        %s2344 = ssub.f32 0.0, %s2343
        %v2345 = vstv %s2344
        %2346 = vst [vmem:[%s498] sm:$0xff] %v2345
        %s2347 = sand.u32 %s227, 1
        %s2348 = scalar_lea.sflag [#allocation6], %s2347
        %s2349 = sand.u32 %s227, 1
        %s2350 = smul.addr %s2349, 128
        %s2351 = scalar_lea.vmem [#allocation15], %s2350
        %s2352 = sand.u32 %s41, 1
        %s2353 = scalar_lea.sflag [#allocation17], %s2352
        %s2354 = sand.u32 %s253, 1
        %s2355 = smul.addr %s2354, 128
        %s2356 = scalar_lea.vmem [#allocation16], %s2355
        %s2357 = sand.u32 %s41, 1
        %s2358 = scalar_lea.sflag [#allocation17], %s2357
        %s2359 = sand.u32 %s279, 1
        %s2360 = smul.addr %s2359, 8
        %s2361 = scalar_lea.vmem [#allocation18], %s2360
        // Predicated region
        $region77: #{tpu_custom_call.1} parent=51 // pred_check
          %p2362 = pneg %p237
        $region78: #{tpu_custom_call.1} parent=51 // pred_check_branch
          %2364 = sbr.rel (%p2362) target = $region80
        $region79: #{tpu_custom_call.1} parent=51 // pred_region
          %s2366 = ssub.s32 2048, 2048
          %2367 = vsyncadd %s2348, %s2366
          %s2368 = smul.addr %s41, 16
          %s2369 = smul.addr %s2368, 128
          %s2370 = scalar_lea.hbm %s9, %s2369
          %s2371 = sshll.u32 %s2351, 4
          %s2372 = int_to_ptr.vmem [resolvable:$true] %s2371
          %2377 = dma.vmem_to_hbm [thread:$0]  %s2372, 2048, %s2370, %s2348, 128, 128, 8
        $region80: #{tpu_custom_call.1} parent=51 // pred_fallthru
          _
        // Predicated region
        $region81: #{tpu_custom_call.1} parent=51 // pred_check
          %p2378 = pneg %p263
        $region82: #{tpu_custom_call.1} parent=51 // pred_check_branch
          %2380 = sbr.rel (%p2378) target = $region84
        $region83: #{tpu_custom_call.1} parent=51 // pred_region
          %s2382 = ssub.s32 2048, 2048
          %2383 = vsyncadd %s2353, %s2382
          %s2384 = smul.addr %s41, 16
          %s2385 = smul.addr %s2384, 128
          %s2386 = scalar_lea.hbm %s10, %s2385
          %s2387 = sshll.u32 %s2356, 4
          %s2388 = int_to_ptr.vmem [resolvable:$true] %s2387
          %2393 = dma.vmem_to_hbm [thread:$0]  %s2388, 2048, %s2386, %s2353, 128, 128, 8
        $region84: #{tpu_custom_call.1} parent=51 // pred_fallthru
          _
        // Predicated region
        $region85: #{tpu_custom_call.1} parent=51 // pred_check
          %p2394 = pneg %p289
        $region86: #{tpu_custom_call.1} parent=51 // pred_check_branch
          %2396 = sbr.rel (%p2394) target = $region88
        $region87: #{tpu_custom_call.1} parent=51 // pred_region
          %s2398 = ssub.s32 128, 128
          %2399 = vsyncadd %s2358, %s2398
          %s2400 = smul.addr %s41, 128
          %s2401 = scalar_lea.hbm %s11, %s2400
          %s2403 = sshll.u32 %s2361, 4
          %s2404 = int_to_ptr.vmem [resolvable:$true] %s2403
          %2406 = dma.vmem_to_hbm [thread:$0]  %s2404, 128, %s2401, %s2358
        $region88: #{tpu_custom_call.1} parent=51 // pred_fallthru
          _
      $region52: #{tpu_custom_call.1} parent=5 // pred_fallthru
        _
      %p2407 = scmp.le.s32.totalorder 2, %s36
      // Predicated region
      $region89: #{tpu_custom_call.1} parent=5 // pred_check
        %p2408 = pneg %p2407
      $region90: #{tpu_custom_call.1} parent=5 // pred_check_branch
        %2410 = sbr.rel (%p2408) target = $region92
      $region91: #{tpu_custom_call.1} parent=5 // pred_region
        %s2411 = ssub.s32 %s36, 2
        // Predicated region
        $region93: #{tpu_custom_call.1} parent=91 // pred_check
          %p2412 = pneg %p243
        $region94: #{tpu_custom_call.1} parent=91 // pred_check_branch
          %2414 = sbr.rel (%p2412) target = $region96
        $region95: #{tpu_custom_call.1} parent=91 // pred_region
          %s2415 = sand.u32 %s228, 1
          %s2416 = scalar_lea.sflag [#allocation6], %s2415
          %s2417 = sand.u32 %s228, 1
          %s2418 = smul.addr %s2417, 128
          %s2419 = scalar_lea.vmem [#allocation15], %s2418
          %2420 = dma.done %s2416, 2048
        $region96: #{tpu_custom_call.1} parent=91 // pred_fallthru
          _
        // Predicated region
        $region97: #{tpu_custom_call.1} parent=91 // pred_check
          %p2421 = pneg %p269
        $region98: #{tpu_custom_call.1} parent=91 // pred_check_branch
          %2423 = sbr.rel (%p2421) target = $region100
        $region99: #{tpu_custom_call.1} parent=91 // pred_region
          %s2424 = sand.u32 %s42, 1
          %s2425 = scalar_lea.sflag [#allocation17], %s2424
          %s2426 = sand.u32 %s254, 1
          %s2427 = smul.addr %s2426, 128
          %s2428 = scalar_lea.vmem [#allocation16], %s2427
          %2429 = dma.done %s2425, 2048
        $region100: #{tpu_custom_call.1} parent=91 // pred_fallthru
          _
        // Predicated region
        $region101: #{tpu_custom_call.1} parent=91 // pred_check
          %p2430 = pneg %p295
        $region102: #{tpu_custom_call.1} parent=91 // pred_check_branch
          %2432 = sbr.rel (%p2430) target = $region104
        $region103: #{tpu_custom_call.1} parent=91 // pred_region
          %s2433 = sand.u32 %s42, 1
          %s2434 = scalar_lea.sflag [#allocation17], %s2433
          %s2435 = sand.u32 %s280, 1
          %s2436 = smul.addr %s2435, 8
          %s2437 = scalar_lea.vmem [#allocation18], %s2436
          %2438 = dma.done %s2434, 128
        $region104: #{tpu_custom_call.1} parent=91 // pred_fallthru
          _
      $region92: #{tpu_custom_call.1} parent=5 // pred_fallthru
        _
    $region6: #{tpu_custom_call.1} parent=1 // loop_footer
      %s40 = sadd.s32 1, %s36
    $region7: #{tpu_custom_call.1} parent=1 // loop_footer_branch
      %35 = sbr.rel target = $region3
    $region8: #{tpu_custom_call.1} parent=1 // loop_exit
      _
    %2439 = vsyncpa [#allocation5], 1
    %s2440 = scalar_lea.sflag [#allocation5], 1
    %2441 = vsyncpa %s2440, 1
    %2442 = vsyncpa [#allocation8], 1
    %s2443 = scalar_lea.sflag [#allocation8], 1
    %2444 = vsyncpa %s2443, 1
    %2445 = vsyncpa [#allocation11], 1
    %2446 = vsyncpa [#allocation14], 1
    %2447 = vsyncpa [#allocation6], 1
    %s2448 = scalar_lea.sflag [#allocation6], 1
    %2449 = vsyncpa %s2448, 1
    %2450 = vsyncpa [#allocation17], 1
    %s2451 = scalar_lea.sflag [#allocation17], 1
    %2452 = vsyncpa %s2451, 1

</llo_original>
